<compile_context>
chip_gen: v5e
topology: v5e:2x2
jax: 0.10.0
libtpu: 0.0.40
codegen_flags: <defaults>
</compile_context>

<pallas_src>
import numpy as np
import jax
import jax.numpy as jnp
from jax.experimental import pallas as pl
from jax.experimental.pallas import tpu as pltpu

KSIZE = 5                      # all convs are 5x5, stride 1
_DOT_DTYPE = jnp.bfloat16      # MXU-native input dtype (f32 accumulation)


# ------------------------------ kernel side -------------------------------- #
def _conv_rows(x_ref, m_ref, b_ref, act="relu"):
    """5x5 valid conv of one image held as a 2-D (H, W*Cin) slab.

    x_ref : (H, W*Cin) f32 ref            activation, channel-minor in lanes
    m_ref : (5, W*Cin, Wo*Cout) bf16 ref   banded weight matrices (one per dy)
    b_ref : (1, Wo*Cout) f32 ref           bias, tiled over output columns
    returns (Ho, Wo*Cout) f32 value after bias + ReLU (+ Sigmoid).
    """
    ho = x_ref.shape[0] - KSIZE + 1
    acc = jnp.zeros((ho, m_ref.shape[2]), jnp.float32)
    for dy in range(KSIZE):                      # 5 lane-dense MXU matmuls
        rows = x_ref[dy:dy + ho, :].astype(_DOT_DTYPE)
        acc = acc + jnp.dot(rows, m_ref[dy], preferred_element_type=jnp.float32)
    acc = jnp.maximum(acc + b_ref[...], 0.0)     # bias + ReLU in f32
    if act == "relu_sigmoid":                    # final decoder layer
        acc = jax.nn.sigmoid(acc)
    return acc


def _store_padded(val, pad_ref, channels):
    """Write `val` (h, w*c) into the centre of zeroed `pad_ref` (h+8, (w+8)*c)."""
    pad_ref[...] = jnp.zeros(pad_ref.shape, jnp.float32)
    r0 = KSIZE - 1
    c0 = (KSIZE - 1) * channels
    pad_ref[r0:r0 + val.shape[0], c0:c0 + val.shape[1]] = val


def _autoencoder_kernel(x_ref, m1_ref, b1_ref, m2_ref, b2_ref,
                        m3_ref, b3_ref, m4_ref, b4_ref,
                        o_ref, a1_ref, p1_ref, p2_ref):
    # ----- encoder -----
    a1_ref[...] = _conv_rows(x_ref, m1_ref, b1_ref)          # (H-4, (W-4)*6)
    a2 = _conv_rows(a1_ref, m2_ref, b2_ref)                  # (H-8, (W-8)*16)
    # ----- decoder: ConvT(k5,s1,p0) == zero-pad by 4 + conv w/ flipped kernel
    _store_padded(a2, p1_ref, 16)                            # (H,   W*16)
    a3 = _conv_rows(p1_ref, m3_ref, b3_ref)                  # (H-4, (W-4)*6)
    _store_padded(a3, p2_ref, 6)                             # (H+4, (W+4)*6)
    o_ref[...] = _conv_rows(p2_ref, m4_ref, b4_ref, act="relu_sigmoid")  # (H, W)


# ------------------------------ wrapper side -------------------------------- #
def _band_matrices(w_hwio, w_in):
    """(5,5,Cin,Cout) HWIO weight -> (5, w_in*Cin, Wo*Cout) banded matrices (bf16).

    M[dy, jx*Cin+ci, j*Cout+co] = w[dy, jx-j, ci, co] if 0 <= jx-j < 5 else 0,
    so  conv_out[i, j*Cout+co] = sum_dy (x2d[i+dy, :] @ M[dy])[j*Cout+co].
    """
    kh, kw, cin, cout = w_hwio.shape
    wo = w_in - kw + 1
    jx = np.arange(w_in)[:, None, None]
    dx = np.arange(kw)[None, :, None]
    jj = np.arange(wo)[None, None, :]
    ind = jnp.asarray((jx == jj + dx).astype(np.float32))      # (w_in, kw, wo)
    m = jnp.einsum("xdj,kdio->kxijo", ind, w_hwio)             # exact scatter of w
    return m.reshape(kh, w_in * cin, wo * cout).astype(_DOT_DTYPE)


def _tiled_bias(b, wo):
    return jnp.tile(b.astype(jnp.float32), wo).reshape(1, -1)


def _forward_impl(params, x_nchw):
    n, c, h, w = x_nchw.shape
    assert c == 1, "Autoencoder expects a single input channel"
    ho1, wo1 = h - 4, w - 4          # after enc1 / dec1
    ho2, wo2 = h - 8, w - 8          # after enc2

    # PyTorch layouts -> HWIO conv weights (ConvT: flip spatially, swap in/out)
    w1 = jnp.transpose(params["enc1_w"], (2, 3, 1, 0))                      # (5,5,1,6)
    w2 = jnp.transpose(params["enc2_w"], (2, 3, 1, 0))                      # (5,5,6,16)
    w3 = jnp.transpose(jnp.flip(params["dec1_w"], (2, 3)), (2, 3, 0, 1))    # (5,5,16,6)
    w4 = jnp.transpose(jnp.flip(params["dec2_w"], (2, 3)), (2, 3, 0, 1))    # (5,5,6,1)

    m1 = _band_matrices(w1, w)             # conv over (h, w, 1)
    m2 = _band_matrices(w2, wo1)           # conv over (ho1, wo1, 6)
    m3 = _band_matrices(w3, wo2 + 8)       # conv over padded (ho2+8, wo2+8, 16)
    m4 = _band_matrices(w4, wo1 + 8)       # conv over padded (ho1+8, wo1+8, 6)

    b1 = _tiled_bias(params["enc1_b"], wo1)
    b2 = _tiled_bias(params["enc2_b"], wo2)
    b3 = _tiled_bias(params["dec1_b"], wo1)
    b4 = _tiled_bias(params["dec2_b"], w)

    x2d = x_nchw.reshape(n, h, w)          # NCHW with C==1 -> (N, H, W), free

    const3 = lambda i: (0, 0, 0)
    const2 = lambda i: (0, 0)
    grid_spec = pltpu.PrefetchScalarGridSpec(
        num_scalar_prefetch=0,
        grid=(n,),                                          # one image per step
        in_specs=[
            pl.BlockSpec((None, h, w), lambda i: (i, 0, 0)),    # image i
            pl.BlockSpec(m1.shape, const3), pl.BlockSpec(b1.shape, const2),
            pl.BlockSpec(m2.shape, const3), pl.BlockSpec(b2.shape, const2),
            pl.BlockSpec(m3.shape, const3), pl.BlockSpec(b3.shape, const2),
            pl.BlockSpec(m4.shape, const3), pl.BlockSpec(b4.shape, const2),
        ],
        out_specs=pl.BlockSpec((None, h, w), lambda i: (i, 0, 0)),
        scratch_shapes=[
            pltpu.VMEM((ho1, wo1 * 6), jnp.float32),                # enc1 out
            pltpu.VMEM((ho2 + 8, (wo2 + 8) * 16), jnp.float32),     # padded enc2 out
            pltpu.VMEM((ho1 + 8, (wo1 + 8) * 6), jnp.float32),      # padded dec1 out
        ],
    )
    out2d = pl.pallas_call(
        _autoencoder_kernel,
        out_shape=jax.ShapeDtypeStruct((n, h, w), jnp.float32),
        grid_spec=grid_spec,
        compiler_params=pltpu.CompilerParams(
            dimension_semantics=("parallel",),      # megacore / 2 TCs on v7x
            vmem_limit_bytes=32 * 1024 * 1024,
        ),
    )(x2d, m1, b1, m2, b2, m3, b3, m4, b4)
    return out2d.reshape(n, 1, h, w)


autoencoder_forward = jax.jit(_forward_impl)


# ------------------------------ parameters ---------------------------------- #
def _uniform(key, shape, fan_in):
    bound = 1.0 / np.sqrt(float(fan_in))
    return jax.random.uniform(key, shape, jnp.float32, -bound, bound)


def init_params(key):
    ks = jax.random.split(key, 8)
    return {
        # encoder: Conv2d weights are OIHW
        "enc1_w": _uniform(ks[0], (6, 1, 5, 5), 1 * 25),
        "enc1_b": _uniform(ks[1], (6,), 1 * 25),
        "enc2_w": _uniform(ks[2], (16, 6, 5, 5), 6 * 25),
        "enc2_b": _uniform(ks[3], (16,), 6 * 25),
        # decoder: ConvTranspose2d weights are IOHW (Cin, Cout, kh, kw)
        "dec1_w": _uniform(ks[4], (16, 6, 5, 5), 16 * 25),
        "dec1_b": _uniform(ks[5], (6,), 16 * 25),
        "dec2_w": _uniform(ks[6], (6, 1, 5, 5), 6 * 25),
        "dec2_b": _uniform(ks[7], (1,), 6 * 25),
    }


# ------------------------- plain-XLA reference (check) ---------------------- #
def _reference_forward(params, x_nchw):
    dn = ("NCHW", "OIHW", "NCHW")
    hi = jax.lax.Precision.HIGHEST

    def conv(x, w, b):
        y = jax.lax.conv_general_dilated(x, w, (1, 1), "VALID",
                                         dimension_numbers=dn, precision=hi)
        return jax.nn.relu(y + b[None, :, None, None])

    def convt(x, w, b):                 # w: (Cin, Cout, 5, 5), stride 1, pad 0
        w_conv = jnp.transpose(jnp.flip(w, (2, 3)), (1, 0, 2, 3))
        y = jax.lax.conv_general_dilated(x, w_conv, (1, 1), [(4, 4), (4, 4)],
                                         dimension_numbers=dn, precision=hi)
        return jax.nn.relu(y + b[None, :, None, None])

    x = conv(x_nchw, params["enc1_w"], params["enc1_b"])
    x = conv(x, params["enc2_w"], params["enc2_b"])
    x = convt(x, params["dec1_w"], params["dec1_b"])
    x = jax.nn.sigmoid(convt(x, params["dec2_w"], params["dec2_b"]))  # ReLU then Sigmoid, per module
    return x


if __name__ == "__main__":
    x = jax.random.normal(jax.random.PRNGKey(0), (2, 1, 16, 16), jnp.float32)
    params = init_params(jax.random.PRNGKey(42))

    y = autoencoder_forward(params, x)
    jax.block_until_ready(y)

    assert y.shape == (2, 1, 16, 16), y.shape
    assert y.dtype == jnp.float32

    # cross-check against a plain-XLA reference (bf16 MXU feed -> loose tol)
    y_ref = jax.jit(_reference_forward)(params, x)
    err = float(jnp.max(jnp.abs(y - y_ref)))
    assert err < 2e-2, f"max abs error vs reference: {err}"

    print("KERNEL_OK")
</pallas_src>

<mosaic_0001>
module attributes {stable_mosaic.version = 11 : i64} {
  func.func @_autoencoder_kernel(%arg0: i32, %arg1: memref<1x16x16xf32, #tpu.memory_space<vmem>>, %arg2: memref<5x16x72xbf16, #tpu.memory_space<vmem>>, %arg3: memref<1x72xf32, #tpu.memory_space<vmem>>, %arg4: memref<5x72x128xbf16, #tpu.memory_space<vmem>>, %arg5: memref<1x128xf32, #tpu.memory_space<vmem>>, %arg6: memref<5x256x72xbf16, #tpu.memory_space<vmem>>, %arg7: memref<1x72xf32, #tpu.memory_space<vmem>>, %arg8: memref<5x120x16xbf16, #tpu.memory_space<vmem>>, %arg9: memref<1x16xf32, #tpu.memory_space<vmem>>, %arg10: memref<1x16x16xf32, #tpu.memory_space<vmem>>, %arg11: memref<12x72xf32, #tpu.memory_space<vmem>>, %arg12: memref<16x256xf32, #tpu.memory_space<vmem>>, %arg13: memref<20x120xf32, #tpu.memory_space<vmem>>) attributes {dimension_semantics = [#tpu.dimension_semantics<parallel>], iteration_bounds = array<i64: 2>, scalar_prefetch = 0 : i64, scratch_operands = 3 : i64, tpu.core_type = #tpu.core_type<tc>, window_params = [{transform_indices = @transform_0, window_bounds = array<i64: 1, 16, 16>}, {pipeline_mode = #tpu.pipeline_mode<synchronous>, transform_indices = @transform_1, window_bounds = array<i64: 5, 16, 72>}, {pipeline_mode = #tpu.pipeline_mode<synchronous>, transform_indices = @transform_2, window_bounds = array<i64: 1, 72>}, {pipeline_mode = #tpu.pipeline_mode<synchronous>, transform_indices = @transform_3, window_bounds = array<i64: 5, 72, 128>}, {pipeline_mode = #tpu.pipeline_mode<synchronous>, transform_indices = @transform_4, window_bounds = array<i64: 1, 128>}, {pipeline_mode = #tpu.pipeline_mode<synchronous>, transform_indices = @transform_5, window_bounds = array<i64: 5, 256, 72>}, {pipeline_mode = #tpu.pipeline_mode<synchronous>, transform_indices = @transform_6, window_bounds = array<i64: 1, 72>}, {pipeline_mode = #tpu.pipeline_mode<synchronous>, transform_indices = @transform_7, window_bounds = array<i64: 5, 120, 16>}, {pipeline_mode = #tpu.pipeline_mode<synchronous>, transform_indices = @transform_8, window_bounds = array<i64: 1, 16>}, {transform_indices = @transform_9, window_bounds = array<i64: 1, 16, 16>}]} {
    %cst = arith.constant 0.000000e+00 : f32
    %0 = vector.broadcast %cst : f32 to vector<12x72xf32>
    %c0 = arith.constant 0 : index
    %c0_0 = arith.constant 0 : index
    %c0_1 = arith.constant 0 : index
    %1 = vector.load %arg1[%c0, %c0_0, %c0_1] : memref<1x16x16xf32, #tpu.memory_space<vmem>>, vector<1x12x16xf32>
    %2 = vector.shape_cast %1 : vector<1x12x16xf32> to vector<12x16xf32>
    %3 = arith.truncf %2 : vector<12x16xf32> to vector<12x16xbf16>
    %c0_2 = arith.constant 0 : index
    %c0_3 = arith.constant 0 : index
    %c0_4 = arith.constant 0 : index
    %4 = vector.load %arg2[%c0_2, %c0_3, %c0_4] : memref<5x16x72xbf16, #tpu.memory_space<vmem>>, vector<1x16x72xbf16>
    %5 = vector.shape_cast %4 : vector<1x16x72xbf16> to vector<16x72xbf16>
    %cst_5 = arith.constant dense<0.000000e+00> : vector<12x72xf32>
    %6 = tpu.matmul %3, %5, %cst_5 {dimension_numbers = #tpu.dot_dimension_numbers<[1], [0], [0], [1], [0, 0, 1, 1], [], []>} : vector<12x16xbf16>, vector<16x72xbf16>, vector<12x72xf32> -> vector<12x72xf32>
    %7 = arith.addf %0, %6 : vector<12x72xf32>
    %c0_6 = arith.constant 0 : index
    %c1 = arith.constant 1 : index
    %c0_7 = arith.constant 0 : index
    %8 = vector.load %arg1[%c0_6, %c1, %c0_7] : memref<1x16x16xf32, #tpu.memory_space<vmem>>, vector<1x12x16xf32>
    %9 = vector.shape_cast %8 : vector<1x12x16xf32> to vector<12x16xf32>
    %10 = arith.truncf %9 : vector<12x16xf32> to vector<12x16xbf16>
    %c1_8 = arith.constant 1 : index
    %c0_9 = arith.constant 0 : index
    %c0_10 = arith.constant 0 : index
    %11 = vector.load %arg2[%c1_8, %c0_9, %c0_10] : memref<5x16x72xbf16, #tpu.memory_space<vmem>>, vector<1x16x72xbf16>
    %12 = vector.shape_cast %11 : vector<1x16x72xbf16> to vector<16x72xbf16>
    %cst_11 = arith.constant dense<0.000000e+00> : vector<12x72xf32>
    %13 = tpu.matmul %10, %12, %cst_11 {dimension_numbers = #tpu.dot_dimension_numbers<[1], [0], [0], [1], [0, 0, 1, 1], [], []>} : vector<12x16xbf16>, vector<16x72xbf16>, vector<12x72xf32> -> vector<12x72xf32>
    %14 = arith.addf %7, %13 : vector<12x72xf32>
    %c0_12 = arith.constant 0 : index
    %c2 = arith.constant 2 : index
    %c0_13 = arith.constant 0 : index
    %15 = vector.load %arg1[%c0_12, %c2, %c0_13] : memref<1x16x16xf32, #tpu.memory_space<vmem>>, vector<1x12x16xf32>
    %16 = vector.shape_cast %15 : vector<1x12x16xf32> to vector<12x16xf32>
    %17 = arith.truncf %16 : vector<12x16xf32> to vector<12x16xbf16>
    %c2_14 = arith.constant 2 : index
    %c0_15 = arith.constant 0 : index
    %c0_16 = arith.constant 0 : index
    %18 = vector.load %arg2[%c2_14, %c0_15, %c0_16] : memref<5x16x72xbf16, #tpu.memory_space<vmem>>, vector<1x16x72xbf16>
    %19 = vector.shape_cast %18 : vector<1x16x72xbf16> to vector<16x72xbf16>
    %cst_17 = arith.constant dense<0.000000e+00> : vector<12x72xf32>
    %20 = tpu.matmul %17, %19, %cst_17 {dimension_numbers = #tpu.dot_dimension_numbers<[1], [0], [0], [1], [0, 0, 1, 1], [], []>} : vector<12x16xbf16>, vector<16x72xbf16>, vector<12x72xf32> -> vector<12x72xf32>
    %21 = arith.addf %14, %20 : vector<12x72xf32>
    %c0_18 = arith.constant 0 : index
    %c3 = arith.constant 3 : index
    %c0_19 = arith.constant 0 : index
    %22 = vector.load %arg1[%c0_18, %c3, %c0_19] : memref<1x16x16xf32, #tpu.memory_space<vmem>>, vector<1x12x16xf32>
    %23 = vector.shape_cast %22 : vector<1x12x16xf32> to vector<12x16xf32>
    %24 = arith.truncf %23 : vector<12x16xf32> to vector<12x16xbf16>
    %c3_20 = arith.constant 3 : index
    %c0_21 = arith.constant 0 : index
    %c0_22 = arith.constant 0 : index
    %25 = vector.load %arg2[%c3_20, %c0_21, %c0_22] : memref<5x16x72xbf16, #tpu.memory_space<vmem>>, vector<1x16x72xbf16>
    %26 = vector.shape_cast %25 : vector<1x16x72xbf16> to vector<16x72xbf16>
    %cst_23 = arith.constant dense<0.000000e+00> : vector<12x72xf32>
    %27 = tpu.matmul %24, %26, %cst_23 {dimension_numbers = #tpu.dot_dimension_numbers<[1], [0], [0], [1], [0, 0, 1, 1], [], []>} : vector<12x16xbf16>, vector<16x72xbf16>, vector<12x72xf32> -> vector<12x72xf32>
    %28 = arith.addf %21, %27 : vector<12x72xf32>
    %c0_24 = arith.constant 0 : index
    %c4 = arith.constant 4 : index
    %c0_25 = arith.constant 0 : index
    %29 = vector.load %arg1[%c0_24, %c4, %c0_25] : memref<1x16x16xf32, #tpu.memory_space<vmem>>, vector<1x12x16xf32>
    %30 = vector.shape_cast %29 : vector<1x12x16xf32> to vector<12x16xf32>
    %31 = arith.truncf %30 : vector<12x16xf32> to vector<12x16xbf16>
    %c4_26 = arith.constant 4 : index
    %c0_27 = arith.constant 0 : index
    %c0_28 = arith.constant 0 : index
    %32 = vector.load %arg2[%c4_26, %c0_27, %c0_28] : memref<5x16x72xbf16, #tpu.memory_space<vmem>>, vector<1x16x72xbf16>
    %33 = vector.shape_cast %32 : vector<1x16x72xbf16> to vector<16x72xbf16>
    %cst_29 = arith.constant dense<0.000000e+00> : vector<12x72xf32>
    %34 = tpu.matmul %31, %33, %cst_29 {dimension_numbers = #tpu.dot_dimension_numbers<[1], [0], [0], [1], [0, 0, 1, 1], [], []>} : vector<12x16xbf16>, vector<16x72xbf16>, vector<12x72xf32> -> vector<12x72xf32>
    %35 = arith.addf %28, %34 : vector<12x72xf32>
    %c0_30 = arith.constant 0 : index
    %c0_31 = arith.constant 0 : index
    %36 = vector.load %arg3[%c0_30, %c0_31] : memref<1x72xf32, #tpu.memory_space<vmem>>, vector<1x72xf32>
    %37 = vector.broadcast %36 : vector<1x72xf32> to vector<12x72xf32>
    %38 = arith.addf %35, %37 : vector<12x72xf32>
    %cst_32 = arith.constant 0.000000e+00 : f32
    %39 = vector.broadcast %cst_32 : f32 to vector<12x72xf32>
    %40 = arith.maximumf %38, %39 : vector<12x72xf32>
    %c0_33 = arith.constant 0 : index
    %c0_34 = arith.constant 0 : index
    %41 = vector.load %arg11[%c0_33, %c0_34] : memref<12x72xf32, #tpu.memory_space<vmem>>, vector<12x72xf32>
    tpu.vector_store %arg11[%c0_33, %c0_34], %40 {strides = array<i32>} : memref<12x72xf32, #tpu.memory_space<vmem>>, vector<12x72xf32>,
    %cst_35 = arith.constant 0.000000e+00 : f32
    %42 = vector.broadcast %cst_35 : f32 to vector<8x128xf32>
    %c0_36 = arith.constant 0 : index
    %c0_37 = arith.constant 0 : index
    %43 = vector.load %arg11[%c0_36, %c0_37] : memref<12x72xf32, #tpu.memory_space<vmem>>, vector<8x72xf32>
    %44 = arith.truncf %43 : vector<8x72xf32> to vector<8x72xbf16>
    %c0_38 = arith.constant 0 : index
    %c0_39 = arith.constant 0 : index
    %c0_40 = arith.constant 0 : index
    %45 = vector.load %arg4[%c0_38, %c0_39, %c0_40] : memref<5x72x128xbf16, #tpu.memory_space<vmem>>, vector<1x72x128xbf16>
    %46 = vector.shape_cast %45 : vector<1x72x128xbf16> to vector<72x128xbf16>
    %cst_41 = arith.constant dense<0.000000e+00> : vector<8x128xf32>
    %47 = tpu.matmul %44, %46, %cst_41 {dimension_numbers = #tpu.dot_dimension_numbers<[1], [0], [0], [1], [0, 0, 1, 1], [], []>} : vector<8x72xbf16>, vector<72x128xbf16>, vector<8x128xf32> -> vector<8x128xf32>
    %48 = arith.addf %42, %47 : vector<8x128xf32>
    %c1_42 = arith.constant 1 : index
    %c0_43 = arith.constant 0 : index
    %49 = vector.load %arg11[%c1_42, %c0_43] : memref<12x72xf32, #tpu.memory_space<vmem>>, vector<8x72xf32>
    %50 = arith.truncf %49 : vector<8x72xf32> to vector<8x72xbf16>
    %c1_44 = arith.constant 1 : index
    %c0_45 = arith.constant 0 : index
    %c0_46 = arith.constant 0 : index
    %51 = vector.load %arg4[%c1_44, %c0_45, %c0_46] : memref<5x72x128xbf16, #tpu.memory_space<vmem>>, vector<1x72x128xbf16>
    %52 = vector.shape_cast %51 : vector<1x72x128xbf16> to vector<72x128xbf16>
    %cst_47 = arith.constant dense<0.000000e+00> : vector<8x128xf32>
    %53 = tpu.matmul %50, %52, %cst_47 {dimension_numbers = #tpu.dot_dimension_numbers<[1], [0], [0], [1], [0, 0, 1, 1], [], []>} : vector<8x72xbf16>, vector<72x128xbf16>, vector<8x128xf32> -> vector<8x128xf32>
    %54 = arith.addf %48, %53 : vector<8x128xf32>
    %c2_48 = arith.constant 2 : index
    %c0_49 = arith.constant 0 : index
    %55 = vector.load %arg11[%c2_48, %c0_49] : memref<12x72xf32, #tpu.memory_space<vmem>>, vector<8x72xf32>
    %56 = arith.truncf %55 : vector<8x72xf32> to vector<8x72xbf16>
    %c2_50 = arith.constant 2 : index
    %c0_51 = arith.constant 0 : index
    %c0_52 = arith.constant 0 : index
    %57 = vector.load %arg4[%c2_50, %c0_51, %c0_52] : memref<5x72x128xbf16, #tpu.memory_space<vmem>>, vector<1x72x128xbf16>
    %58 = vector.shape_cast %57 : vector<1x72x128xbf16> to vector<72x128xbf16>
    %cst_53 = arith.constant dense<0.000000e+00> : vector<8x128xf32>
    %59 = tpu.matmul %56, %58, %cst_53 {dimension_numbers = #tpu.dot_dimension_numbers<[1], [0], [0], [1], [0, 0, 1, 1], [], []>} : vector<8x72xbf16>, vector<72x128xbf16>, vector<8x128xf32> -> vector<8x128xf32>
    %60 = arith.addf %54, %59 : vector<8x128xf32>
    %c3_54 = arith.constant 3 : index
    %c0_55 = arith.constant 0 : index
    %61 = vector.load %arg11[%c3_54, %c0_55] : memref<12x72xf32, #tpu.memory_space<vmem>>, vector<8x72xf32>
    %62 = arith.truncf %61 : vector<8x72xf32> to vector<8x72xbf16>
    %c3_56 = arith.constant 3 : index
    %c0_57 = arith.constant 0 : index
    %c0_58 = arith.constant 0 : index
    %63 = vector.load %arg4[%c3_56, %c0_57, %c0_58] : memref<5x72x128xbf16, #tpu.memory_space<vmem>>, vector<1x72x128xbf16>
    %64 = vector.shape_cast %63 : vector<1x72x128xbf16> to vector<72x128xbf16>
    %cst_59 = arith.constant dense<0.000000e+00> : vector<8x128xf32>
    %65 = tpu.matmul %62, %64, %cst_59 {dimension_numbers = #tpu.dot_dimension_numbers<[1], [0], [0], [1], [0, 0, 1, 1], [], []>} : vector<8x72xbf16>, vector<72x128xbf16>, vector<8x128xf32> -> vector<8x128xf32>
    %66 = arith.addf %60, %65 : vector<8x128xf32>
    %c4_60 = arith.constant 4 : index
    %c0_61 = arith.constant 0 : index
    %67 = vector.load %arg11[%c4_60, %c0_61] : memref<12x72xf32, #tpu.memory_space<vmem>>, vector<8x72xf32>
    %68 = arith.truncf %67 : vector<8x72xf32> to vector<8x72xbf16>
    %c4_62 = arith.constant 4 : index
    %c0_63 = arith.constant 0 : index
    %c0_64 = arith.constant 0 : index
    %69 = vector.load %arg4[%c4_62, %c0_63, %c0_64] : memref<5x72x128xbf16, #tpu.memory_space<vmem>>, vector<1x72x128xbf16>
    %70 = vector.shape_cast %69 : vector<1x72x128xbf16> to vector<72x128xbf16>
    %cst_65 = arith.constant dense<0.000000e+00> : vector<8x128xf32>
    %71 = tpu.matmul %68, %70, %cst_65 {dimension_numbers = #tpu.dot_dimension_numbers<[1], [0], [0], [1], [0, 0, 1, 1], [], []>} : vector<8x72xbf16>, vector<72x128xbf16>, vector<8x128xf32> -> vector<8x128xf32>
    %72 = arith.addf %66, %71 : vector<8x128xf32>
    %c0_66 = arith.constant 0 : index
    %c0_67 = arith.constant 0 : index
    %73 = vector.load %arg5[%c0_66, %c0_67] : memref<1x128xf32, #tpu.memory_space<vmem>>, vector<1x128xf32>
    %74 = vector.broadcast %73 : vector<1x128xf32> to vector<8x128xf32>
    %75 = arith.addf %72, %74 : vector<8x128xf32>
    %cst_68 = arith.constant 0.000000e+00 : f32
    %76 = vector.broadcast %cst_68 : f32 to vector<8x128xf32>
    %77 = arith.maximumf %75, %76 : vector<8x128xf32>
    %cst_69 = arith.constant 0.000000e+00 : f32
    %78 = vector.broadcast %cst_69 : f32 to vector<16x256xf32>
    %c0_70 = arith.constant 0 : index
    %c0_71 = arith.constant 0 : index
    %79 = vector.load %arg12[%c0_70, %c0_71] : memref<16x256xf32, #tpu.memory_space<vmem>>, vector<16x256xf32>
    tpu.vector_store %arg12[%c0_70, %c0_71], %78 {strides = array<i32>} : memref<16x256xf32, #tpu.memory_space<vmem>>, vector<16x256xf32>,
    %c4_72 = arith.constant 4 : index
    %c64 = arith.constant 64 : index
    %80 = vector.load %arg12[%c4_72, %c64] : memref<16x256xf32, #tpu.memory_space<vmem>>, vector<8x128xf32>
    tpu.vector_store %arg12[%c4_72, %c64], %77 {strides = array<i32>} : memref<16x256xf32, #tpu.memory_space<vmem>>, vector<8x128xf32>,
    %cst_73 = arith.constant 0.000000e+00 : f32
    %81 = vector.broadcast %cst_73 : f32 to vector<12x72xf32>
    %c0_74 = arith.constant 0 : index
    %c0_75 = arith.constant 0 : index
    %82 = vector.load %arg12[%c0_74, %c0_75] : memref<16x256xf32, #tpu.memory_space<vmem>>, vector<12x256xf32>
    %83 = arith.truncf %82 : vector<12x256xf32> to vector<12x256xbf16>
    %c0_76 = arith.constant 0 : index
    %c0_77 = arith.constant 0 : index
    %c0_78 = arith.constant 0 : index
    %84 = vector.load %arg6[%c0_76, %c0_77, %c0_78] : memref<5x256x72xbf16, #tpu.memory_space<vmem>>, vector<1x256x72xbf16>
    %85 = vector.shape_cast %84 : vector<1x256x72xbf16> to vector<256x72xbf16>
    %cst_79 = arith.constant dense<0.000000e+00> : vector<12x72xf32>
    %86 = tpu.matmul %83, %85, %cst_79 {dimension_numbers = #tpu.dot_dimension_numbers<[1], [0], [0], [1], [0, 0, 1, 1], [], []>} : vector<12x256xbf16>, vector<256x72xbf16>, vector<12x72xf32> -> vector<12x72xf32>
    %87 = arith.addf %81, %86 : vector<12x72xf32>
    %c1_80 = arith.constant 1 : index
    %c0_81 = arith.constant 0 : index
    %88 = vector.load %arg12[%c1_80, %c0_81] : memref<16x256xf32, #tpu.memory_space<vmem>>, vector<12x256xf32>
    %89 = arith.truncf %88 : vector<12x256xf32> to vector<12x256xbf16>
    %c1_82 = arith.constant 1 : index
    %c0_83 = arith.constant 0 : index
    %c0_84 = arith.constant 0 : index
    %90 = vector.load %arg6[%c1_82, %c0_83, %c0_84] : memref<5x256x72xbf16, #tpu.memory_space<vmem>>, vector<1x256x72xbf16>
    %91 = vector.shape_cast %90 : vector<1x256x72xbf16> to vector<256x72xbf16>
    %cst_85 = arith.constant dense<0.000000e+00> : vector<12x72xf32>
    %92 = tpu.matmul %89, %91, %cst_85 {dimension_numbers = #tpu.dot_dimension_numbers<[1], [0], [0], [1], [0, 0, 1, 1], [], []>} : vector<12x256xbf16>, vector<256x72xbf16>, vector<12x72xf32> -> vector<12x72xf32>
    %93 = arith.addf %87, %92 : vector<12x72xf32>
    %c2_86 = arith.constant 2 : index
    %c0_87 = arith.constant 0 : index
    %94 = vector.load %arg12[%c2_86, %c0_87] : memref<16x256xf32, #tpu.memory_space<vmem>>, vector<12x256xf32>
    %95 = arith.truncf %94 : vector<12x256xf32> to vector<12x256xbf16>
    %c2_88 = arith.constant 2 : index
    %c0_89 = arith.constant 0 : index
    %c0_90 = arith.constant 0 : index
    %96 = vector.load %arg6[%c2_88, %c0_89, %c0_90] : memref<5x256x72xbf16, #tpu.memory_space<vmem>>, vector<1x256x72xbf16>
    %97 = vector.shape_cast %96 : vector<1x256x72xbf16> to vector<256x72xbf16>
    %cst_91 = arith.constant dense<0.000000e+00> : vector<12x72xf32>
    %98 = tpu.matmul %95, %97, %cst_91 {dimension_numbers = #tpu.dot_dimension_numbers<[1], [0], [0], [1], [0, 0, 1, 1], [], []>} : vector<12x256xbf16>, vector<256x72xbf16>, vector<12x72xf32> -> vector<12x72xf32>
    %99 = arith.addf %93, %98 : vector<12x72xf32>
    %c3_92 = arith.constant 3 : index
    %c0_93 = arith.constant 0 : index
    %100 = vector.load %arg12[%c3_92, %c0_93] : memref<16x256xf32, #tpu.memory_space<vmem>>, vector<12x256xf32>
    %101 = arith.truncf %100 : vector<12x256xf32> to vector<12x256xbf16>
    %c3_94 = arith.constant 3 : index
    %c0_95 = arith.constant 0 : index
    %c0_96 = arith.constant 0 : index
    %102 = vector.load %arg6[%c3_94, %c0_95, %c0_96] : memref<5x256x72xbf16, #tpu.memory_space<vmem>>, vector<1x256x72xbf16>
    %103 = vector.shape_cast %102 : vector<1x256x72xbf16> to vector<256x72xbf16>
    %cst_97 = arith.constant dense<0.000000e+00> : vector<12x72xf32>
    %104 = tpu.matmul %101, %103, %cst_97 {dimension_numbers = #tpu.dot_dimension_numbers<[1], [0], [0], [1], [0, 0, 1, 1], [], []>} : vector<12x256xbf16>, vector<256x72xbf16>, vector<12x72xf32> -> vector<12x72xf32>
    %105 = arith.addf %99, %104 : vector<12x72xf32>
    %c4_98 = arith.constant 4 : index
    %c0_99 = arith.constant 0 : index
    %106 = vector.load %arg12[%c4_98, %c0_99] : memref<16x256xf32, #tpu.memory_space<vmem>>, vector<12x256xf32>
    %107 = arith.truncf %106 : vector<12x256xf32> to vector<12x256xbf16>
    %c4_100 = arith.constant 4 : index
    %c0_101 = arith.constant 0 : index
    %c0_102 = arith.constant 0 : index
    %108 = vector.load %arg6[%c4_100, %c0_101, %c0_102] : memref<5x256x72xbf16, #tpu.memory_space<vmem>>, vector<1x256x72xbf16>
    %109 = vector.shape_cast %108 : vector<1x256x72xbf16> to vector<256x72xbf16>
    %cst_103 = arith.constant dense<0.000000e+00> : vector<12x72xf32>
    %110 = tpu.matmul %107, %109, %cst_103 {dimension_numbers = #tpu.dot_dimension_numbers<[1], [0], [0], [1], [0, 0, 1, 1], [], []>} : vector<12x256xbf16>, vector<256x72xbf16>, vector<12x72xf32> -> vector<12x72xf32>
    %111 = arith.addf %105, %110 : vector<12x72xf32>
    %c0_104 = arith.constant 0 : index
    %c0_105 = arith.constant 0 : index
    %112 = vector.load %arg7[%c0_104, %c0_105] : memref<1x72xf32, #tpu.memory_space<vmem>>, vector<1x72xf32>
    %113 = vector.broadcast %112 : vector<1x72xf32> to vector<12x72xf32>
    %114 = arith.addf %111, %113 : vector<12x72xf32>
    %cst_106 = arith.constant 0.000000e+00 : f32
    %115 = vector.broadcast %cst_106 : f32 to vector<12x72xf32>
    %116 = arith.maximumf %114, %115 : vector<12x72xf32>
    %cst_107 = arith.constant 0.000000e+00 : f32
    %117 = vector.broadcast %cst_107 : f32 to vector<20x120xf32>
    %c0_108 = arith.constant 0 : index
    %c0_109 = arith.constant 0 : index
    %118 = vector.load %arg13[%c0_108, %c0_109] : memref<20x120xf32, #tpu.memory_space<vmem>>, vector<20x120xf32>
    tpu.vector_store %arg13[%c0_108, %c0_109], %117 {strides = array<i32>} : memref<20x120xf32, #tpu.memory_space<vmem>>, vector<20x120xf32>,
    %c4_110 = arith.constant 4 : index
    %c24 = arith.constant 24 : index
    %119 = vector.load %arg13[%c4_110, %c24] : memref<20x120xf32, #tpu.memory_space<vmem>>, vector<12x72xf32>
    tpu.vector_store %arg13[%c4_110, %c24], %116 {strides = array<i32>} : memref<20x120xf32, #tpu.memory_space<vmem>>, vector<12x72xf32>,
    %cst_111 = arith.constant 0.000000e+00 : f32
    %120 = vector.broadcast %cst_111 : f32 to vector<16x16xf32>
    %c0_112 = arith.constant 0 : index
    %c0_113 = arith.constant 0 : index
    %121 = vector.load %arg13[%c0_112, %c0_113] : memref<20x120xf32, #tpu.memory_space<vmem>>, vector<16x120xf32>
    %122 = arith.truncf %121 : vector<16x120xf32> to vector<16x120xbf16>
    %c0_114 = arith.constant 0 : index
    %c0_115 = arith.constant 0 : index
    %c0_116 = arith.constant 0 : index
    %123 = vector.load %arg8[%c0_114, %c0_115, %c0_116] : memref<5x120x16xbf16, #tpu.memory_space<vmem>>, vector<1x120x16xbf16>
    %124 = vector.shape_cast %123 : vector<1x120x16xbf16> to vector<120x16xbf16>
    %cst_117 = arith.constant dense<0.000000e+00> : vector<16x16xf32>
    %125 = tpu.matmul %122, %124, %cst_117 {dimension_numbers = #tpu.dot_dimension_numbers<[1], [0], [0], [1], [0, 0, 1, 1], [], []>} : vector<16x120xbf16>, vector<120x16xbf16>, vector<16x16xf32> -> vector<16x16xf32>
    %126 = arith.addf %120, %125 : vector<16x16xf32>
    %c1_118 = arith.constant 1 : index
    %c0_119 = arith.constant 0 : index
    %127 = vector.load %arg13[%c1_118, %c0_119] : memref<20x120xf32, #tpu.memory_space<vmem>>, vector<16x120xf32>
    %128 = arith.truncf %127 : vector<16x120xf32> to vector<16x120xbf16>
    %c1_120 = arith.constant 1 : index
    %c0_121 = arith.constant 0 : index
    %c0_122 = arith.constant 0 : index
    %129 = vector.load %arg8[%c1_120, %c0_121, %c0_122] : memref<5x120x16xbf16, #tpu.memory_space<vmem>>, vector<1x120x16xbf16>
    %130 = vector.shape_cast %129 : vector<1x120x16xbf16> to vector<120x16xbf16>
    %cst_123 = arith.constant dense<0.000000e+00> : vector<16x16xf32>
    %131 = tpu.matmul %128, %130, %cst_123 {dimension_numbers = #tpu.dot_dimension_numbers<[1], [0], [0], [1], [0, 0, 1, 1], [], []>} : vector<16x120xbf16>, vector<120x16xbf16>, vector<16x16xf32> -> vector<16x16xf32>
    %132 = arith.addf %126, %131 : vector<16x16xf32>
    %c2_124 = arith.constant 2 : index
    %c0_125 = arith.constant 0 : index
    %133 = vector.load %arg13[%c2_124, %c0_125] : memref<20x120xf32, #tpu.memory_space<vmem>>, vector<16x120xf32>
    %134 = arith.truncf %133 : vector<16x120xf32> to vector<16x120xbf16>
    %c2_126 = arith.constant 2 : index
    %c0_127 = arith.constant 0 : index
    %c0_128 = arith.constant 0 : index
    %135 = vector.load %arg8[%c2_126, %c0_127, %c0_128] : memref<5x120x16xbf16, #tpu.memory_space<vmem>>, vector<1x120x16xbf16>
    %136 = vector.shape_cast %135 : vector<1x120x16xbf16> to vector<120x16xbf16>
    %cst_129 = arith.constant dense<0.000000e+00> : vector<16x16xf32>
    %137 = tpu.matmul %134, %136, %cst_129 {dimension_numbers = #tpu.dot_dimension_numbers<[1], [0], [0], [1], [0, 0, 1, 1], [], []>} : vector<16x120xbf16>, vector<120x16xbf16>, vector<16x16xf32> -> vector<16x16xf32>
    %138 = arith.addf %132, %137 : vector<16x16xf32>
    %c3_130 = arith.constant 3 : index
    %c0_131 = arith.constant 0 : index
    %139 = vector.load %arg13[%c3_130, %c0_131] : memref<20x120xf32, #tpu.memory_space<vmem>>, vector<16x120xf32>
    %140 = arith.truncf %139 : vector<16x120xf32> to vector<16x120xbf16>
    %c3_132 = arith.constant 3 : index
    %c0_133 = arith.constant 0 : index
    %c0_134 = arith.constant 0 : index
    %141 = vector.load %arg8[%c3_132, %c0_133, %c0_134] : memref<5x120x16xbf16, #tpu.memory_space<vmem>>, vector<1x120x16xbf16>
    %142 = vector.shape_cast %141 : vector<1x120x16xbf16> to vector<120x16xbf16>
    %cst_135 = arith.constant dense<0.000000e+00> : vector<16x16xf32>
    %143 = tpu.matmul %140, %142, %cst_135 {dimension_numbers = #tpu.dot_dimension_numbers<[1], [0], [0], [1], [0, 0, 1, 1], [], []>} : vector<16x120xbf16>, vector<120x16xbf16>, vector<16x16xf32> -> vector<16x16xf32>
    %144 = arith.addf %138, %143 : vector<16x16xf32>
    %c4_136 = arith.constant 4 : index
    %c0_137 = arith.constant 0 : index
    %145 = vector.load %arg13[%c4_136, %c0_137] : memref<20x120xf32, #tpu.memory_space<vmem>>, vector<16x120xf32>
    %146 = arith.truncf %145 : vector<16x120xf32> to vector<16x120xbf16>
    %c4_138 = arith.constant 4 : index
    %c0_139 = arith.constant 0 : index
    %c0_140 = arith.constant 0 : index
    %147 = vector.load %arg8[%c4_138, %c0_139, %c0_140] : memref<5x120x16xbf16, #tpu.memory_space<vmem>>, vector<1x120x16xbf16>
    %148 = vector.shape_cast %147 : vector<1x120x16xbf16> to vector<120x16xbf16>
    %cst_141 = arith.constant dense<0.000000e+00> : vector<16x16xf32>
    %149 = tpu.matmul %146, %148, %cst_141 {dimension_numbers = #tpu.dot_dimension_numbers<[1], [0], [0], [1], [0, 0, 1, 1], [], []>} : vector<16x120xbf16>, vector<120x16xbf16>, vector<16x16xf32> -> vector<16x16xf32>
    %150 = arith.addf %144, %149 : vector<16x16xf32>
    %c0_142 = arith.constant 0 : index
    %c0_143 = arith.constant 0 : index
    %151 = vector.load %arg9[%c0_142, %c0_143] : memref<1x16xf32, #tpu.memory_space<vmem>>, vector<1x16xf32>
    %152 = vector.broadcast %151 : vector<1x16xf32> to vector<16x16xf32>
    %153 = arith.addf %150, %152 : vector<16x16xf32>
    %cst_144 = arith.constant 0.000000e+00 : f32
    %154 = vector.broadcast %cst_144 : f32 to vector<16x16xf32>
    %155 = arith.maximumf %153, %154 : vector<16x16xf32>
    %156 = arith.negf %155 : vector<16x16xf32>
    %157 = math.exp %156 : vector<16x16xf32>
    %cst_145 = arith.constant 1.000000e+00 : f32
    %158 = vector.broadcast %cst_145 : f32 to vector<16x16xf32>
    %159 = arith.addf %158, %157 : vector<16x16xf32>
    %160 = arith.divf %158, %159 : vector<16x16xf32>
    %c0_146 = arith.constant 0 : index
    %c0_147 = arith.constant 0 : index
    %c0_148 = arith.constant 0 : index
    %161 = vector.load %arg10[%c0_146, %c0_147, %c0_148] : memref<1x16x16xf32, #tpu.memory_space<vmem>>, vector<1x16x16xf32>
    %162 = vector.shape_cast %161 : vector<1x16x16xf32> to vector<16x16xf32>
    %163 = vector.shape_cast %160 : vector<16x16xf32> to vector<1x16x16xf32>
    tpu.vector_store %arg10[%c0_146, %c0_147, %c0_148], %163 {strides = array<i32>} : memref<1x16x16xf32, #tpu.memory_space<vmem>>, vector<1x16x16xf32>,
    return
  }
  func.func @transform_0(%arg0: i32) -> (i32, i32, i32) {
    %c0_i32 = arith.constant 0 : i32
    %c0_i32_0 = arith.constant 0 : i32
    %c0_i32_1 = arith.constant 0 : i32
    return %arg0, %c0_i32, %c0_i32_0 : i32, i32, i32
  }
  func.func @transform_1(%arg0: i32) -> (i32, i32, i32) {
    %c0_i32 = arith.constant 0 : i32
    %c0_i32_0 = arith.constant 0 : i32
    %c0_i32_1 = arith.constant 0 : i32
    %c0_i32_2 = arith.constant 0 : i32
    return %c0_i32, %c0_i32_0, %c0_i32_1 : i32, i32, i32
  }
  func.func @transform_2(%arg0: i32) -> (i32, i32) {
    %c0_i32 = arith.constant 0 : i32
    %c0_i32_0 = arith.constant 0 : i32
    %c0_i32_1 = arith.constant 0 : i32
    return %c0_i32, %c0_i32_0 : i32, i32
  }
  func.func @transform_3(%arg0: i32) -> (i32, i32, i32) {
    %c0_i32 = arith.constant 0 : i32
    %c0_i32_0 = arith.constant 0 : i32
    %c0_i32_1 = arith.constant 0 : i32
    %c0_i32_2 = arith.constant 0 : i32
    return %c0_i32, %c0_i32_0, %c0_i32_1 : i32, i32, i32
  }
  func.func @transform_4(%arg0: i32) -> (i32, i32) {
    %c0_i32 = arith.constant 0 : i32
    %c0_i32_0 = arith.constant 0 : i32
    %c0_i32_1 = arith.constant 0 : i32
    return %c0_i32, %c0_i32_0 : i32, i32
  }
  func.func @transform_5(%arg0: i32) -> (i32, i32, i32) {
    %c0_i32 = arith.constant 0 : i32
    %c0_i32_0 = arith.constant 0 : i32
    %c0_i32_1 = arith.constant 0 : i32
    %c0_i32_2 = arith.constant 0 : i32
    return %c0_i32, %c0_i32_0, %c0_i32_1 : i32, i32, i32
  }
  func.func @transform_6(%arg0: i32) -> (i32, i32) {
    %c0_i32 = arith.constant 0 : i32
    %c0_i32_0 = arith.constant 0 : i32
    %c0_i32_1 = arith.constant 0 : i32
    return %c0_i32, %c0_i32_0 : i32, i32
  }
  func.func @transform_7(%arg0: i32) -> (i32, i32, i32) {
    %c0_i32 = arith.constant 0 : i32
    %c0_i32_0 = arith.constant 0 : i32
    %c0_i32_1 = arith.constant 0 : i32
    %c0_i32_2 = arith.constant 0 : i32
    return %c0_i32, %c0_i32_0, %c0_i32_1 : i32, i32, i32
  }
  func.func @transform_8(%arg0: i32) -> (i32, i32) {
    %c0_i32 = arith.constant 0 : i32
    %c0_i32_0 = arith.constant 0 : i32
    %c0_i32_1 = arith.constant 0 : i32
    return %c0_i32, %c0_i32_0 : i32, i32
  }
  func.func @transform_9(%arg0: i32) -> (i32, i32, i32) {
    %c0_i32 = arith.constant 0 : i32
    %c0_i32_0 = arith.constant 0 : i32
    %c0_i32_1 = arith.constant 0 : i32
    return %arg0, %c0_i32, %c0_i32_0 : i32, i32, i32
  }
}

</mosaic_0001>

<llo_original>
// kernel: tile.23
$region0: #{tile.23}
  #allocation0 [shape = 's32[1]{0}', space=sflag, size = 0x4, scoped, tag = 'scoped memory for tile.23']
  %s0 = inlined_call_operand.vmem [shape: f32[6], index: 0, kind: input, shape index: {}]
  %s1 = inlined_call_operand.vmem [shape: f32[12,6], index: 1, kind: output, shape index: {}]
  // Predicated region
  $region2: #{tile.23} parent=0 // pred_check
    _
  $region3: #{tile.23} parent=0 // pred_check_branch
    %3 = sbr.rel (0) target = $region5
  $region4: #{tile.23} parent=0 // pred_region
    _
  $region5: #{tile.23} parent=0 // pred_fallthru
    _
  %v4 = vld [vmem:[%s0] ss:$0 sm:$0xff]
  %5 = vst [vmem:[%s1] sm:$0xff] %v4
  %s6 = scalar_lea.vmem %s1, 8
  %7 = vst [vmem:[%s6] sm:$0xff] %v4

// kernel: tile.24
$region0: #{tile.24}
  %s0 = inlined_call_operand.vmem [shape: f32[12,6], index: 0, kind: input, shape index: {}]
  %s1 = inlined_call_operand.vmem [shape: f32[1,72], index: 1, kind: output, shape index: {}]
  $region1: #{tile.24} parent=0
    #allocation0 [shape = 'u8[4096]{0}', space=vmem, size = 0x1000, scoped, tag = 'scoped mem for output reshape']
    %v2 = vld [vmem:[%s0] sm:$0x1]
    %vm3 = vcmask 48128
    %4 = vst.msk [vmem:[#allocation0] sm:$0x1] %vm3, %v2
    %s5 = scalar_lea.vmem %s0, 11
    %v6 = vld [vmem:[%s5] sm:$0x1]
    %7 = vrot.lane.b32.xlu0 %v6, 66
    %v8 = vpop.permute.xlu0 %7
    %vm9 = vcmask 589328
    %10 = vst.msk [vmem:[#allocation0] sm:$0x1] %vm9, %v8
    %s11 = scalar_lea.vmem %s0, 10
    %v12 = vld [vmem:[%s11] sm:$0x1]
    %13 = vrot.lane.b32.xlu0 %v12, 60
    %v14 = vpop.permute.xlu0 %13
    %vm15 = vcmask 540128
    %16 = vst.msk [vmem:[#allocation0] sm:$0x1] %vm15, %v14
    %s17 = scalar_lea.vmem %s0, 9
    %v18 = vld [vmem:[%s17] sm:$0x1]
    %19 = vrot.lane.b32.xlu0 %v18, 54
    %v20 = vpop.permute.xlu0 %19
    %vm21 = vcmask 490928
    %22 = vst.msk [vmem:[#allocation0] sm:$0x1] %vm21, %v20
    %s23 = scalar_lea.vmem %s0, 8
    %v24 = vld [vmem:[%s23] sm:$0x1]
    %25 = vrot.lane.b32.xlu0 %v24, 48
    %v26 = vpop.permute.xlu0 %25
    %vm27 = vcmask 441728
    %28 = vst.msk [vmem:[#allocation0] sm:$0x1] %vm27, %v26
    %s29 = scalar_lea.vmem %s0, 7
    %v30 = vld [vmem:[%s29] sm:$0x1]
    %31 = vrot.lane.b32.xlu0 %v30, 42
    %v32 = vpop.permute.xlu0 %31
    %vm33 = vcmask 392528
    %34 = vst.msk [vmem:[#allocation0] sm:$0x1] %vm33, %v32
    %s35 = scalar_lea.vmem %s0, 6
    %v36 = vld [vmem:[%s35] sm:$0x1]
    %37 = vrot.lane.b32.xlu0 %v36, 36
    %v38 = vpop.permute.xlu0 %37
    %vm39 = vcmask 343328
    %40 = vst.msk [vmem:[#allocation0] sm:$0x1] %vm39, %v38
    %s41 = scalar_lea.vmem %s0, 5
    %v42 = vld [vmem:[%s41] sm:$0x1]
    %43 = vrot.lane.b32.xlu0 %v42, 30
    %v44 = vpop.permute.xlu0 %43
    %vm45 = vcmask 294128
    %46 = vst.msk [vmem:[#allocation0] sm:$0x1] %vm45, %v44
    %s47 = scalar_lea.vmem %s0, 4
    %v48 = vld [vmem:[%s47] sm:$0x1]
    %49 = vrot.lane.b32.xlu0 %v48, 24
    %v50 = vpop.permute.xlu0 %49
    %vm51 = vcmask 244928
    %52 = vst.msk [vmem:[#allocation0] sm:$0x1] %vm51, %v50
    %s53 = scalar_lea.vmem %s0, 3
    %v54 = vld [vmem:[%s53] sm:$0x1]
    %55 = vrot.lane.b32.xlu0 %v54, 18
    %v56 = vpop.permute.xlu0 %55
    %vm57 = vcmask 195728
    %58 = vst.msk [vmem:[#allocation0] sm:$0x1] %vm57, %v56
    %s59 = scalar_lea.vmem %s0, 2
    %v60 = vld [vmem:[%s59] sm:$0x1]
    %61 = vrot.lane.b32.xlu0 %v60, 12
    %v62 = vpop.permute.xlu0 %61
    %vm63 = vcmask 146528
    %64 = vst.msk [vmem:[#allocation0] sm:$0x1] %vm63, %v62
    %s65 = scalar_lea.vmem %s0, 1
    %v66 = vld [vmem:[%s65] sm:$0x1]
    %67 = vrot.lane.b32.xlu0 %v66, 6
    %v68 = vpop.permute.xlu0 %67
    %vm69 = vcmask 97328
    %70 = vst.msk [vmem:[#allocation0] sm:$0x1] %vm69, %v68
    %s72 = ssub.s32 2, 1
    %v73 = vld [vmem:[#allocation0] sm:%s72]
    %s75 = ssub.s32 2, 1
    %76 = vst [vmem:[%s1] sm:%s75] %v73

// kernel: tile.28
$region0: #{tile.28}
  #allocation0 [shape = 's32[1]{0}', space=sflag, size = 0x4, scoped, tag = 'scoped memory for tile.28']
  %s0 = inlined_call_operand.vmem [shape: f32[16], index: 0, kind: input, shape index: {}]
  %s1 = inlined_call_operand.vmem [shape: f32[8,16], index: 1, kind: output, shape index: {}]
  // Predicated region
  $region2: #{tile.28} parent=0 // pred_check
    _
  $region3: #{tile.28} parent=0 // pred_check_branch
    %3 = sbr.rel (0) target = $region5
  $region4: #{tile.28} parent=0 // pred_region
    _
  $region5: #{tile.28} parent=0 // pred_fallthru
    _
  %v4 = vld [vmem:[%s0] ss:$0 sm:$0xff]
  %5 = vst [vmem:[%s1] sm:$0xff] %v4

// kernel: tile.29
$region0: #{tile.29}
  %s0 = inlined_call_operand.vmem [shape: f32[8,16], index: 0, kind: input, shape index: {}]
  %s1 = inlined_call_operand.vmem [shape: f32[1,128], index: 1, kind: output, shape index: {}]
  $region1: #{tile.29} parent=0
    #allocation0 [shape = 'u8[4096]{0}', space=vmem, size = 0x1000, scoped, tag = 'scoped mem for output reshape']
    %v2 = vld [vmem:[%s0] sm:$0x1]
    %vm3 = vcmask 130048
    %4 = vst.msk [vmem:[#allocation0] sm:$0x1] %vm3, %v2
    %s5 = scalar_lea.vmem %s0, 7
    %v6 = vld [vmem:[%s5] sm:$0x1]
    %7 = vrot.lane.b32.xlu0 %v6, 112
    %v8 = vpop.permute.xlu0 %7
    %vm9 = vcmask 1048448
    %10 = vst.msk [vmem:[#allocation0] sm:$0x1] %vm9, %v8
    %s11 = scalar_lea.vmem %s0, 6
    %v12 = vld [vmem:[%s11] sm:$0x1]
    %13 = vrot.lane.b32.xlu0 %v12, 96
    %v14 = vpop.permute.xlu0 %13
    %vm15 = vcmask 917248
    %16 = vst.msk [vmem:[#allocation0] sm:$0x1] %vm15, %v14
    %s17 = scalar_lea.vmem %s0, 5
    %v18 = vld [vmem:[%s17] sm:$0x1]
    %19 = vrot.lane.b32.xlu0 %v18, 80
    %v20 = vpop.permute.xlu0 %19
    %vm21 = vcmask 786048
    %22 = vst.msk [vmem:[#allocation0] sm:$0x1] %vm21, %v20
    %s23 = scalar_lea.vmem %s0, 4
    %v24 = vld [vmem:[%s23] sm:$0x1]
    %25 = vrot.lane.b32.xlu0 %v24, 64
    %v26 = vpop.permute.xlu0 %25
    %vm27 = vcmask 654848
    %28 = vst.msk [vmem:[#allocation0] sm:$0x1] %vm27, %v26
    %s29 = scalar_lea.vmem %s0, 3
    %v30 = vld [vmem:[%s29] sm:$0x1]
    %31 = vrot.lane.b32.xlu0 %v30, 48
    %v32 = vpop.permute.xlu0 %31
    %vm33 = vcmask 523648
    %34 = vst.msk [vmem:[#allocation0] sm:$0x1] %vm33, %v32
    %s35 = scalar_lea.vmem %s0, 2
    %v36 = vld [vmem:[%s35] sm:$0x1]
    %37 = vrot.lane.b32.xlu0 %v36, 32
    %v38 = vpop.permute.xlu0 %37
    %vm39 = vcmask 392448
    %40 = vst.msk [vmem:[#allocation0] sm:$0x1] %vm39, %v38
    %s41 = scalar_lea.vmem %s0, 1
    %v42 = vld [vmem:[%s41] sm:$0x1]
    %43 = vrot.lane.b32.xlu0 %v42, 16
    %v44 = vpop.permute.xlu0 %43
    %vm45 = vcmask 261248
    %46 = vst.msk [vmem:[#allocation0] sm:$0x1] %vm45, %v44
    %s48 = ssub.s32 2, 1
    %v49 = vld [vmem:[#allocation0] sm:%s48]
    %s51 = ssub.s32 2, 1
    %52 = vst [vmem:[%s1] sm:%s51] %v49

// kernel: _forward_impl.1
$region0: #{_forward_impl.1}
  #allocation0 [shape = 'u32[]', space=smem, size = 0x4, offset = 0x4, fixed_abs, tag = 'smem constant byte address 0x4 - core index']
  #allocation1 [shape = 'u32[72,128]{1,0:T(1,128)}', space=vmem, size = 0x9000, scoped, tag = 'internal scratch']
  #allocation2 [shape = 'f32[12,72]{1,0:T(8,128)}', space=vmem, size = 0x2000, scoped, tag = 'scratch operand']
  #allocation3 [shape = 'f32[16,256]{1,0:T(8,128)}', space=vmem, size = 0x4000, scoped, tag = 'scratch operand']
  #allocation4 [shape = 'f32[20,120]{1,0:T(8,128)}', space=vmem, size = 0x3000, scoped, tag = 'scratch operand']
  %s0 = inlined_call_operand.vmem [shape: f32[2,16,16], index: 0, kind: input, shape index: {}]
  %s1 = inlined_call_operand.vmem [shape: bf16[5,16,72], index: 1, kind: input, shape index: {}]
  %s2 = inlined_call_operand.vmem [shape: f32[1,72], index: 2, kind: input, shape index: {}]
  %s3 = inlined_call_operand.vmem [shape: bf16[5,72,128], index: 3, kind: input, shape index: {}]
  %s4 = inlined_call_operand.vmem [shape: f32[1,128], index: 4, kind: input, shape index: {}]
  %s5 = inlined_call_operand.vmem [shape: bf16[5,256,72], index: 5, kind: input, shape index: {}]
  %s6 = inlined_call_operand.vmem [shape: f32[1,72], index: 6, kind: input, shape index: {}]
  %s7 = inlined_call_operand.vmem [shape: bf16[5,120,16], index: 7, kind: input, shape index: {}]
  %s8 = inlined_call_operand.vmem [shape: f32[1,16], index: 8, kind: input, shape index: {}]
  %s9 = inlined_call_operand.hbm [shape: f32[2,16,16], index: 9, kind: output, shape index: {}]
  %s10 = sld [smem:[#allocation0]]
  $region69: #{_forward_impl.1} parent=0
    _
  %s12 = ssub.s32 1, %s10
  %s13 = scalar_select 0, %s12, %s10
  $region1: #{_forward_impl.1} parent=0
    #allocation5 [shape = 'u8[16384]{0}', space=vmem, size = 0x4000, scoped, tag = 'output window, operand 0']
    #allocation6 [shape = 's32[2]{0}', space=sflag, size = 0x8, scoped, tag = 'scoped memory for _forward_impl.1']
    %14 = vsyncpa [#allocation6], 0
    %s15 = scalar_lea.sflag [#allocation6], 1
    %16 = vsyncpa %s15, 0
    loop: start=0, step=1, limit=4
    $region2: #{_forward_impl.1} parent=1 // loop_pre_header
      _
    $region3: #{_forward_impl.1} parent=1 // loop_header
      %s18 = sphi 0, %s22
      %p19 = scmp.ge.s32.totalorder %s18, 4
      %s28 = sphi 0, %s30
      %s31 = sphi 0, %s28
      %s32 = sphi 0, %s31
      %s48 = sphi 0, %s32
      %s52 = sphi 0, %s52
      %s54 = sphi 0, %s52
      %s55 = sphi 0, %s54
      %s69 = sphi 0, %s55
      %s73 = sphi 0, %s73
      %s75 = sphi 0, %s73
      %s76 = sphi 0, %s75
      %s90 = sphi 0, %s76
      %s94 = sphi 0, %s94
      %s96 = sphi 0, %s94
      %s97 = sphi 0, %s96
      %s111 = sphi 0, %s97
      %s115 = sphi 0, %s115
      %s117 = sphi 0, %s115
      %s118 = sphi 0, %s117
      %s132 = sphi 0, %s118
      %s136 = sphi 0, %s136
      %s138 = sphi 0, %s136
      %s139 = sphi 0, %s138
      %s153 = sphi 0, %s139
      %s157 = sphi 0, %s157
      %s159 = sphi 0, %s157
      %s160 = sphi 0, %s159
      %s174 = sphi 0, %s160
      %s178 = sphi 0, %s178
      %s180 = sphi 0, %s178
      %s181 = sphi 0, %s180
      %s195 = sphi 0, %s181
      %s199 = sphi 0, %s199
      %s201 = sphi 0, %s199
      %s202 = sphi 0, %s201
      %s216 = sphi 0, %s202
      %s222 = sphi 0, %s224
      %s225 = sphi 0, %s222
      %s226 = sphi 0, %s225
      %s242 = sphi 0, %s226
    $region4: #{_forward_impl.1} parent=1 // loop_header_branch
      %21 = sbr.rel (%p19) target = $region8
    $region5: #{_forward_impl.1} parent=1 // loop_body
      %s23 = ssub.s32 %s18, 1
      %s24 = ssub.s32 %s18, 2
      %s25 = sadd.s32 %s18, 1
      %s26 = ssub.s32 %s18, %s25
      %p27 = scmp.eq.s32.totalorder %s26, 0
      %s29 = sadd.s32 %s28, 1
      %s30 = scalar_select %p27, %s28, %s29
      %p33 = pneg %p27
      %p34 = scmp.eq.s32.totalorder %s18, 1
      %p35 = por %p33, %p34
      %p36 = scmp.ne.s32.totalorder %s28, %s31
      %p37 = scmp.eq.s32.totalorder %s18, 0
      %p38 = por %p36, %p37
      %p39 = scmp.ne.s32.totalorder %s28, %s31
      %p40 = scmp.eq.s32.totalorder %s23, 1
      %p41 = por %p39, %p40
      %p42 = scmp.ne.s32.totalorder %s31, %s32
      %p43 = scmp.eq.s32.totalorder %s23, 0
      %p44 = por %p42, %p43
      %p45 = scmp.ne.s32.totalorder %s31, %s32
      %p46 = scmp.eq.s32.totalorder %s24, 1
      %p47 = por %p45, %p46
      %p49 = scmp.ne.s32.totalorder %s32, %s48
      %p50 = scmp.eq.s32.totalorder %s24, 0
      %p51 = por %p49, %p50
      %s53 = sadd.s32 %s52, 1
      %p56 = scmp.eq.s32.totalorder %s18, 1
      %p57 = scmp.ne.s32.totalorder %s52, %s54
      %p58 = scmp.eq.s32.totalorder %s18, 0
      %p59 = por %p57, %p58
      %p60 = scmp.ne.s32.totalorder %s52, %s54
      %p61 = scmp.eq.s32.totalorder %s23, 1
      %p62 = por %p60, %p61
      %p63 = scmp.ne.s32.totalorder %s54, %s55
      %p64 = scmp.eq.s32.totalorder %s23, 0
      %p65 = por %p63, %p64
      %p66 = scmp.ne.s32.totalorder %s54, %s55
      %p67 = scmp.eq.s32.totalorder %s24, 1
      %p68 = por %p66, %p67
      %p70 = scmp.ne.s32.totalorder %s55, %s69
      %p71 = scmp.eq.s32.totalorder %s24, 0
      %p72 = por %p70, %p71
      %s74 = sadd.s32 %s73, 1
      %p77 = scmp.eq.s32.totalorder %s18, 1
      %p78 = scmp.ne.s32.totalorder %s73, %s75
      %p79 = scmp.eq.s32.totalorder %s18, 0
      %p80 = por %p78, %p79
      %p81 = scmp.ne.s32.totalorder %s73, %s75
      %p82 = scmp.eq.s32.totalorder %s23, 1
      %p83 = por %p81, %p82
      %p84 = scmp.ne.s32.totalorder %s75, %s76
      %p85 = scmp.eq.s32.totalorder %s23, 0
      %p86 = por %p84, %p85
      %p87 = scmp.ne.s32.totalorder %s75, %s76
      %p88 = scmp.eq.s32.totalorder %s24, 1
      %p89 = por %p87, %p88
      %p91 = scmp.ne.s32.totalorder %s76, %s90
      %p92 = scmp.eq.s32.totalorder %s24, 0
      %p93 = por %p91, %p92
      %s95 = sadd.s32 %s94, 1
      %p98 = scmp.eq.s32.totalorder %s18, 1
      %p99 = scmp.ne.s32.totalorder %s94, %s96
      %p100 = scmp.eq.s32.totalorder %s18, 0
      %p101 = por %p99, %p100
      %p102 = scmp.ne.s32.totalorder %s94, %s96
      %p103 = scmp.eq.s32.totalorder %s23, 1
      %p104 = por %p102, %p103
      %p105 = scmp.ne.s32.totalorder %s96, %s97
      %p106 = scmp.eq.s32.totalorder %s23, 0
      %p107 = por %p105, %p106
      %p108 = scmp.ne.s32.totalorder %s96, %s97
      %p109 = scmp.eq.s32.totalorder %s24, 1
      %p110 = por %p108, %p109
      %p112 = scmp.ne.s32.totalorder %s97, %s111
      %p113 = scmp.eq.s32.totalorder %s24, 0
      %p114 = por %p112, %p113
      %s116 = sadd.s32 %s115, 1
      %p119 = scmp.eq.s32.totalorder %s18, 1
      %p120 = scmp.ne.s32.totalorder %s115, %s117
      %p121 = scmp.eq.s32.totalorder %s18, 0
      %p122 = por %p120, %p121
      %p123 = scmp.ne.s32.totalorder %s115, %s117
      %p124 = scmp.eq.s32.totalorder %s23, 1
      %p125 = por %p123, %p124
      %p126 = scmp.ne.s32.totalorder %s117, %s118
      %p127 = scmp.eq.s32.totalorder %s23, 0
      %p128 = por %p126, %p127
      %p129 = scmp.ne.s32.totalorder %s117, %s118
      %p130 = scmp.eq.s32.totalorder %s24, 1
      %p131 = por %p129, %p130
      %p133 = scmp.ne.s32.totalorder %s118, %s132
      %p134 = scmp.eq.s32.totalorder %s24, 0
      %p135 = por %p133, %p134
      %s137 = sadd.s32 %s136, 1
      %p140 = scmp.eq.s32.totalorder %s18, 1
      %p141 = scmp.ne.s32.totalorder %s136, %s138
      %p142 = scmp.eq.s32.totalorder %s18, 0
      %p143 = por %p141, %p142
      %p144 = scmp.ne.s32.totalorder %s136, %s138
      %p145 = scmp.eq.s32.totalorder %s23, 1
      %p146 = por %p144, %p145
      %p147 = scmp.ne.s32.totalorder %s138, %s139
      %p148 = scmp.eq.s32.totalorder %s23, 0
      %p149 = por %p147, %p148
      %p150 = scmp.ne.s32.totalorder %s138, %s139
      %p151 = scmp.eq.s32.totalorder %s24, 1
      %p152 = por %p150, %p151
      %p154 = scmp.ne.s32.totalorder %s139, %s153
      %p155 = scmp.eq.s32.totalorder %s24, 0
      %p156 = por %p154, %p155
      %s158 = sadd.s32 %s157, 1
      %p161 = scmp.eq.s32.totalorder %s18, 1
      %p162 = scmp.ne.s32.totalorder %s157, %s159
      %p163 = scmp.eq.s32.totalorder %s18, 0
      %p164 = por %p162, %p163
      %p165 = scmp.ne.s32.totalorder %s157, %s159
      %p166 = scmp.eq.s32.totalorder %s23, 1
      %p167 = por %p165, %p166
      %p168 = scmp.ne.s32.totalorder %s159, %s160
      %p169 = scmp.eq.s32.totalorder %s23, 0
      %p170 = por %p168, %p169
      %p171 = scmp.ne.s32.totalorder %s159, %s160
      %p172 = scmp.eq.s32.totalorder %s24, 1
      %p173 = por %p171, %p172
      %p175 = scmp.ne.s32.totalorder %s160, %s174
      %p176 = scmp.eq.s32.totalorder %s24, 0
      %p177 = por %p175, %p176
      %s179 = sadd.s32 %s178, 1
      %p182 = scmp.eq.s32.totalorder %s18, 1
      %p183 = scmp.ne.s32.totalorder %s178, %s180
      %p184 = scmp.eq.s32.totalorder %s18, 0
      %p185 = por %p183, %p184
      %p186 = scmp.ne.s32.totalorder %s178, %s180
      %p187 = scmp.eq.s32.totalorder %s23, 1
      %p188 = por %p186, %p187
      %p189 = scmp.ne.s32.totalorder %s180, %s181
      %p190 = scmp.eq.s32.totalorder %s23, 0
      %p191 = por %p189, %p190
      %p192 = scmp.ne.s32.totalorder %s180, %s181
      %p193 = scmp.eq.s32.totalorder %s24, 1
      %p194 = por %p192, %p193
      %p196 = scmp.ne.s32.totalorder %s181, %s195
      %p197 = scmp.eq.s32.totalorder %s24, 0
      %p198 = por %p196, %p197
      %s200 = sadd.s32 %s199, 1
      %p203 = scmp.eq.s32.totalorder %s18, 1
      %p204 = scmp.ne.s32.totalorder %s199, %s201
      %p205 = scmp.eq.s32.totalorder %s18, 0
      %p206 = por %p204, %p205
      %p207 = scmp.ne.s32.totalorder %s199, %s201
      %p208 = scmp.eq.s32.totalorder %s23, 1
      %p209 = por %p207, %p208
      %p210 = scmp.ne.s32.totalorder %s201, %s202
      %p211 = scmp.eq.s32.totalorder %s23, 0
      %p212 = por %p210, %p211
      %p213 = scmp.ne.s32.totalorder %s201, %s202
      %p214 = scmp.eq.s32.totalorder %s24, 1
      %p215 = por %p213, %p214
      %p217 = scmp.ne.s32.totalorder %s202, %s216
      %p218 = scmp.eq.s32.totalorder %s24, 0
      %p219 = por %p217, %p218
      %s220 = ssub.s32 %s18, %s25
      %p221 = scmp.eq.s32.totalorder %s220, 0
      %s223 = sadd.s32 %s222, 1
      %s224 = scalar_select %p221, %s222, %s223
      %p227 = pneg %p221
      %p228 = scmp.eq.s32.totalorder %s18, 1
      %p229 = por %p227, %p228
      %p230 = scmp.ne.s32.totalorder %s222, %s225
      %p231 = scmp.eq.s32.totalorder %s18, 0
      %p232 = por %p230, %p231
      %p233 = scmp.ne.s32.totalorder %s222, %s225
      %p234 = scmp.eq.s32.totalorder %s23, 1
      %p235 = por %p233, %p234
      %p236 = scmp.ne.s32.totalorder %s225, %s226
      %p237 = scmp.eq.s32.totalorder %s23, 0
      %p238 = por %p236, %p237
      %p239 = scmp.ne.s32.totalorder %s225, %s226
      %p240 = scmp.eq.s32.totalorder %s24, 1
      %p241 = por %p239, %p240
      %p243 = scmp.ne.s32.totalorder %s226, %s242
      %p244 = scmp.eq.s32.totalorder %s24, 0
      %p245 = por %p243, %p244
      %p246 = scmp.le.s32.totalorder 1, %s18
      %p247 = scmp.lt.s32.totalorder %s18, 3
      %p248 = pnand %p246, %p247
      %p249 = pneg %p248
      // Predicated region
      $region9: #{_forward_impl.1} parent=5 // pred_check
        _
      $region10: #{_forward_impl.1} parent=5 // pred_check_branch
        %251 = sbr.rel (%p248) target = $region12
      $region11: #{_forward_impl.1} parent=5 // pred_region
        %s252 = ssub.s32 %s18, 1
        // Predicated region
        $region13: #{_forward_impl.1} parent=11 // pred_check
          %p253 = pneg %p65
        $region14: #{_forward_impl.1} parent=11 // pred_check_branch
          %255 = sbr.rel (%p253) target = $region16
        $region15: #{_forward_impl.1} parent=11 // pred_region
          _
        $region16: #{_forward_impl.1} parent=11 // pred_fallthru
          _
        // Predicated region
        $region17: #{_forward_impl.1} parent=11 // pred_check
          %p256 = pneg %p86
        $region18: #{_forward_impl.1} parent=11 // pred_check_branch
          %258 = sbr.rel (%p256) target = $region20
        $region19: #{_forward_impl.1} parent=11 // pred_region
          _
        $region20: #{_forward_impl.1} parent=11 // pred_fallthru
          _
        // Predicated region
        $region21: #{_forward_impl.1} parent=11 // pred_check
          %p259 = pneg %p107
        $region22: #{_forward_impl.1} parent=11 // pred_check_branch
          %261 = sbr.rel (%p259) target = $region24
        $region23: #{_forward_impl.1} parent=11 // pred_region
          _
        $region24: #{_forward_impl.1} parent=11 // pred_fallthru
          _
        // Predicated region
        $region25: #{_forward_impl.1} parent=11 // pred_check
          %p262 = pneg %p128
        $region26: #{_forward_impl.1} parent=11 // pred_check_branch
          %264 = sbr.rel (%p262) target = $region28
        $region27: #{_forward_impl.1} parent=11 // pred_region
          _
        $region28: #{_forward_impl.1} parent=11 // pred_fallthru
          _
        // Predicated region
        $region29: #{_forward_impl.1} parent=11 // pred_check
          %p265 = pneg %p149
        $region30: #{_forward_impl.1} parent=11 // pred_check_branch
          %267 = sbr.rel (%p265) target = $region32
        $region31: #{_forward_impl.1} parent=11 // pred_region
          _
        $region32: #{_forward_impl.1} parent=11 // pred_fallthru
          _
        // Predicated region
        $region33: #{_forward_impl.1} parent=11 // pred_check
          %p268 = pneg %p170
        $region34: #{_forward_impl.1} parent=11 // pred_check_branch
          %270 = sbr.rel (%p268) target = $region36
        $region35: #{_forward_impl.1} parent=11 // pred_region
          _
        $region36: #{_forward_impl.1} parent=11 // pred_fallthru
          _
        // Predicated region
        $region37: #{_forward_impl.1} parent=11 // pred_check
          %p271 = pneg %p191
        $region38: #{_forward_impl.1} parent=11 // pred_check_branch
          %273 = sbr.rel (%p271) target = $region40
        $region39: #{_forward_impl.1} parent=11 // pred_region
          _
        $region40: #{_forward_impl.1} parent=11 // pred_fallthru
          _
        // Predicated region
        $region41: #{_forward_impl.1} parent=11 // pred_check
          %p274 = pneg %p212
        $region42: #{_forward_impl.1} parent=11 // pred_check_branch
          %276 = sbr.rel (%p274) target = $region44
        $region43: #{_forward_impl.1} parent=11 // pred_region
          _
        $region44: #{_forward_impl.1} parent=11 // pred_fallthru
          _
      $region12: #{_forward_impl.1} parent=5 // pred_fallthru
        _
      %p277 = scmp.lt.s32.totalorder %s18, 2
      // Predicated region
      $region45: #{_forward_impl.1} parent=5 // pred_check
        %p278 = pneg %p277
      $region46: #{_forward_impl.1} parent=5 // pred_check_branch
        %280 = sbr.rel (%p278) target = $region48
      $region47: #{_forward_impl.1} parent=5 // pred_region
        // Predicated region
        $region49: #{_forward_impl.1} parent=47 // pred_check
          %p281 = pneg %p38
        $region50: #{_forward_impl.1} parent=47 // pred_check_branch
          %283 = sbr.rel (%p281) target = $region52
        $region51: #{_forward_impl.1} parent=47 // pred_region
          %p284 = scmp.lt.s32.totalorder %s18, 1
          %s285 = scalar_select %p284, %s18, 1
          %s286 = smul.addr %s285, 2
          %s287 = smul.addr %s286, 8
          %s288 = scalar_lea.vmem %s0, %s287
        $region52: #{_forward_impl.1} parent=47 // pred_fallthru
          _
      $region48: #{_forward_impl.1} parent=5 // pred_fallthru
        _
      %p289 = scmp.le.s32.totalorder 1, %s18
      %p290 = scmp.lt.s32.totalorder %s18, 3
      %p291 = pnand %p289, %p290
      %p292 = pneg %p291
      // Predicated region
      $region53: #{_forward_impl.1} parent=5 // pred_check
        _
      $region54: #{_forward_impl.1} parent=5 // pred_check_branch
        %294 = sbr.rel (%p291) target = $region56
      $region55: #{_forward_impl.1} parent=5 // pred_region
        %s295 = ssub.s32 %s18, 1
        %p296 = scmp.lt.s32.totalorder %s23, 1
        %s297 = scalar_select %p296, %s23, 1
        %s298 = smul.addr %s297, 2
        %s299 = smul.addr %s298, 8
        %s300 = scalar_lea.vmem %s0, %s299
        %p301 = pneg %p44
        %p302 = pneg %p41
        %p303 = pneg %p65
        %p304 = pneg %p62
        %p305 = pneg %p86
        %p306 = pneg %p83
        %p307 = pneg %p107
        %p308 = pneg %p104
        %p309 = pneg %p128
        %p310 = pneg %p125
        %p311 = pneg %p149
        %p312 = pneg %p146
        %p313 = pneg %p170
        %p314 = pneg %p167
        %p315 = pneg %p191
        %p316 = pneg %p188
        %p317 = pneg %p212
        %p318 = pneg %p209
        %p319 = pneg %p238
        %p320 = pneg %p235
        %s321 = sand.u32 %s225, 1
        %s322 = scalar_lea.sflag [#allocation6], %s321
        %s323 = sand.u32 %s225, 1
        %s324 = smul.addr %s323, 16
        %s325 = scalar_lea.vmem [#allocation5], %s324
        %p326 = scmp.lt.s32.totalorder %s23, 1
        %s327 = scalar_select %p326, %s23, 1
        %s328 = smul.addr %s327, 2
        %s329 = smul.addr %s328, 8
        %s330 = scalar_lea.vmem %s0, %s329
        %v332 = vld [vmem:[%s330] sm:$0xff]
        %v333 = vld [vmem:[%s330 + $0x8] sm:$0xf]
        %v334 = vpack.c.bf16 %v333, %v332
        %v335 = vld [vmem:[%s1] sm:$0xf]
        %v336 = vld [vmem:[%s1 + $0x4] sm:$0xf]
        %v337 = vld [vmem:[%s330 + $0x1] sm:$0xff]
        %v338 = vld [vmem:[%s330 + $0x9] sm:$0xf]
        %v339 = vpack.c.bf16 %v338, %v337
        %s340 = scalar_lea.vmem %s1, 8
        %v341 = vld [vmem:[%s340] sm:$0xf]
        %v342 = vld [vmem:[%s340 + $0x4] sm:$0xf]
        %v345 = vunpack.c.l.b16 %v341
        %v346 = vunpack.c.l.b16 %v342
        %v347 = vpack.c.b16 %v346, %v345
        %vm349 = vcmask 130048
        %v351 = vsel %vm349, %v339, 0
        %353 = vmatpush.bf16.msra.mxu0 0
        %354 = vmatpush.bf16.msra.mxu0 0
        %355 = vmatpush.bf16.msra.mxu0 0
        %356 = vmatpush.bf16.msra.mxu0 0
        %357 = vmatpush.bf16.msra.mxu0 0
        %358 = vmatpush.bf16.msra.mxu0 0
        %359 = vmatpush.bf16.msra.mxu0 0
        %360 = vmatpush.bf16.msra.mxu0 %v347
        %361 = vmatmul.bf16.gmra.mxu0 %v351
        %v362 = vpop.f32.mrf.mxu0
        %v363 = vadd.f32 0.0, %v362
        %v364 = vpop.f32.mrf.mxu0
        %v365 = vadd.f32 0.0, %v364
        %366 = vdwg.mxu0
        %v369 = vunpack.c.l.b16 %v335
        %v370 = vunpack.c.l.b16 %v336
        %v371 = vpack.c.b16 %v370, %v369
        %v374 = vsel %vm349, %v334, 0
        %376 = vmatpush.bf16.msra.mxu0 0
        %377 = vmatpush.bf16.msra.mxu0 0
        %378 = vmatpush.bf16.msra.mxu0 0
        %379 = vmatpush.bf16.msra.mxu0 0
        %380 = vmatpush.bf16.msra.mxu0 0
        %381 = vmatpush.bf16.msra.mxu0 0
        %382 = vmatpush.bf16.msra.mxu0 0
        %383 = vmatpush.bf16.msra.mxu0 %v371
        %384 = vmatmul.bf16.gmra.mxu0 %v374
        %v385 = vpop.f32.mrf.mxu0
        %v386 = vadd.f32 %v363, %v385
        %v387 = vpop.f32.mrf.mxu0
        %v388 = vadd.f32 %v365, %v387
        %389 = vdwg.mxu0
        %v390 = vld [vmem:[%s330 + $0x2] sm:$0xff]
        %v391 = vld [vmem:[%s330 + $0xa] sm:$0xf]
        %v392 = vpack.c.bf16 %v391, %v390
        %s393 = scalar_lea.vmem %s1, 16
        %v394 = vld [vmem:[%s393] sm:$0xf]
        %v395 = vld [vmem:[%s393 + $0x4] sm:$0xf]
        %v398 = vunpack.c.l.b16 %v394
        %v399 = vunpack.c.l.b16 %v395
        %v400 = vpack.c.b16 %v399, %v398
        %v403 = vsel %vm349, %v392, 0
        %405 = vmatpush.bf16.msra.mxu0 0
        %406 = vmatpush.bf16.msra.mxu0 0
        %407 = vmatpush.bf16.msra.mxu0 0
        %408 = vmatpush.bf16.msra.mxu0 0
        %409 = vmatpush.bf16.msra.mxu0 0
        %410 = vmatpush.bf16.msra.mxu0 0
        %411 = vmatpush.bf16.msra.mxu0 0
        %412 = vmatpush.bf16.msra.mxu0 %v400
        %413 = vmatmul.bf16.gmra.mxu0 %v403
        %v414 = vpop.f32.mrf.mxu0
        %v415 = vadd.f32 0.0, %v414
        %v416 = vpop.f32.mrf.mxu0
        %v417 = vadd.f32 0.0, %v416
        %418 = vdwg.mxu0
        %v419 = vadd.f32 %v386, %v415
        %v420 = vadd.f32 %v388, %v417
        %v421 = vld [vmem:[%s330 + $0x3] sm:$0xff]
        %v422 = vld [vmem:[%s330 + $0xb] sm:$0xf]
        %v423 = vpack.c.bf16 %v422, %v421
        %s424 = scalar_lea.vmem %s1, 24
        %v425 = vld [vmem:[%s424] sm:$0xf]
        %v426 = vld [vmem:[%s424 + $0x4] sm:$0xf]
        %v429 = vunpack.c.l.b16 %v425
        %v430 = vunpack.c.l.b16 %v426
        %v431 = vpack.c.b16 %v430, %v429
        %v434 = vsel %vm349, %v423, 0
        %436 = vmatpush.bf16.msra.mxu0 0
        %437 = vmatpush.bf16.msra.mxu0 0
        %438 = vmatpush.bf16.msra.mxu0 0
        %439 = vmatpush.bf16.msra.mxu0 0
        %440 = vmatpush.bf16.msra.mxu0 0
        %441 = vmatpush.bf16.msra.mxu0 0
        %442 = vmatpush.bf16.msra.mxu0 0
        %443 = vmatpush.bf16.msra.mxu0 %v431
        %444 = vmatmul.bf16.gmra.mxu0 %v434
        %v445 = vpop.f32.mrf.mxu0
        %v446 = vadd.f32 0.0, %v445
        %v447 = vpop.f32.mrf.mxu0
        %v448 = vadd.f32 0.0, %v447
        %449 = vdwg.mxu0
        %v450 = vadd.f32 %v419, %v446
        %v451 = vadd.f32 %v420, %v448
        %v452 = vld [vmem:[%s330 + $0x4] sm:$0xff]
        %v453 = vld [vmem:[%s330 + $0xc] sm:$0xf]
        %v454 = vpack.c.bf16 %v453, %v452
        %s455 = scalar_lea.vmem %s1, 32
        %v456 = vld [vmem:[%s455] sm:$0xf]
        %v457 = vld [vmem:[%s455 + $0x4] sm:$0xf]
        %v460 = vunpack.c.l.b16 %v456
        %v461 = vunpack.c.l.b16 %v457
        %v462 = vpack.c.b16 %v461, %v460
        %v465 = vsel %vm349, %v454, 0
        %467 = vmatpush.bf16.msra.mxu0 0
        %468 = vmatpush.bf16.msra.mxu0 0
        %469 = vmatpush.bf16.msra.mxu0 0
        %470 = vmatpush.bf16.msra.mxu0 0
        %471 = vmatpush.bf16.msra.mxu0 0
        %472 = vmatpush.bf16.msra.mxu0 0
        %473 = vmatpush.bf16.msra.mxu0 0
        %474 = vmatpush.bf16.msra.mxu0 %v462
        %475 = vmatmul.bf16.gmra.mxu0 %v465
        %v476 = vpop.f32.mrf.mxu0
        %v477 = vadd.f32 0.0, %v476
        %v478 = vpop.f32.mrf.mxu0
        %v479 = vadd.f32 0.0, %v478
        %480 = vdwg.mxu0
        %v481 = vadd.f32 %v450, %v477
        %v482 = vadd.f32 %v451, %v479
        %v483 = vld [vmem:[%s2] sm:$0x1]
        %v485 = vperm.slane %v483, 0
        %v487 = vadd.f32 %v481, %v485
        %v488 = vadd.f32 %v482, %v485
        %v489 = vmax.f32 %v487, 0.0
        %v490 = vmax.f32 %v488, 0.0
        %vm491 = vcmask 588800
        %492 = vst.msk [vmem:[#allocation2] sm:$0xff] %vm491, %v489
        %vm493 = vcmask 584704
        %494 = vst.msk [vmem:[#allocation2 + $0x8] sm:$0xf] %vm493, %v490
        %v495 = vld [vmem:[#allocation2] sm:$0xff]
        %v496 = vpack.c.bf16 %v495, %v495
        %v497 = vld [vmem:[%s3] sm:$0xf]
        %v498 = vld [vmem:[%s3 + $0x4] sm:$0xf]
        %v499 = vld [vmem:[%s3 + $0x8] sm:$0xf]
        %v500 = vld [vmem:[%s3 + $0xc] sm:$0xf]
        %v501 = vld [vmem:[%s3 + $0x10] sm:$0xf]
        %v502 = vld [vmem:[%s3 + $0x14] sm:$0xf]
        %v503 = vld [vmem:[%s3 + $0x18] sm:$0xf]
        %v504 = vld [vmem:[%s3 + $0x1c] sm:$0xf]
        %v505 = vld [vmem:[%s3 + $0x20] sm:$0xf]
        %v506 = vld [vmem:[#allocation2 + $0x1] sm:$0xff]
        %v507 = vpack.c.bf16 %v506, %v506
        %s508 = scalar_lea.vmem %s3, 36
        %v509 = vld [vmem:[%s508] sm:$0xf]
        %v510 = vld [vmem:[%s508 + $0x4] sm:$0xf]
        %v511 = vld [vmem:[%s508 + $0x8] sm:$0xf]
        %v512 = vld [vmem:[%s508 + $0xc] sm:$0xf]
        %v513 = vld [vmem:[%s508 + $0x10] sm:$0xf]
        %v514 = vld [vmem:[%s508 + $0x14] sm:$0xf]
        %v515 = vld [vmem:[%s508 + $0x18] sm:$0xf]
        %v516 = vld [vmem:[%s508 + $0x1c] sm:$0xf]
        %v517 = vld [vmem:[%s508 + $0x20] sm:$0xf]
        %v527 = vunpack.c.l.b16 %v509
        %v528 = vunpack.c.l.b16 %v510
        %v529 = vunpack.c.l.b16 %v511
        %v530 = vunpack.c.l.b16 %v512
        %v531 = vunpack.c.l.b16 %v513
        %v532 = vunpack.c.l.b16 %v514
        %v533 = vunpack.c.l.b16 %v515
        %v534 = vunpack.c.l.b16 %v516
        %v535 = vunpack.c.l.b16 %v517
        %v536 = vpack.c.b16 %v528, %v527
        %v537 = vpack.c.b16 %v530, %v529
        %v538 = vpack.c.b16 %v532, %v531
        %v539 = vpack.c.b16 %v534, %v533
        %v540 = vpack.c.b16 %v535, %v535
        %v546 = vsel %vm491, %v507, 0
        %vm548 = vcmask 1043456
        %v550 = vsel %vm548, %v540, 0
        %552 = vmatpush.bf16.msra.mxu0 0
        %553 = vmatpush.bf16.msra.mxu0 0
        %554 = vmatpush.bf16.msra.mxu0 0
        %555 = vmatpush.bf16.msra.mxu0 %v550
        %556 = vmatpush.bf16.msra.mxu0 %v539
        %557 = vmatpush.bf16.msra.mxu0 %v538
        %558 = vmatpush.bf16.msra.mxu0 %v537
        %559 = vmatpush.bf16.msra.mxu0 %v536
        %560 = vmatmul.bf16.gmra.mxu0 %v546
        %v561 = vpop.f32.mrf.mxu0
        %v562 = vadd.f32 0.0, %v561
        %v563 = vpop.f32.mrf.mxu0
        %564 = vdwg.mxu0
        %v574 = vunpack.c.l.b16 %v497
        %v575 = vunpack.c.l.b16 %v498
        %v576 = vunpack.c.l.b16 %v499
        %v577 = vunpack.c.l.b16 %v500
        %v578 = vunpack.c.l.b16 %v501
        %v579 = vunpack.c.l.b16 %v502
        %v580 = vunpack.c.l.b16 %v503
        %v581 = vunpack.c.l.b16 %v504
        %v582 = vunpack.c.l.b16 %v505
        %v583 = vpack.c.b16 %v575, %v574
        %v584 = vpack.c.b16 %v577, %v576
        %v585 = vpack.c.b16 %v579, %v578
        %v586 = vpack.c.b16 %v581, %v580
        %v587 = vpack.c.b16 %v582, %v582
        %v593 = vsel %vm491, %v496, 0
        %v596 = vsel %vm548, %v587, 0
        %598 = vmatpush.bf16.msra.mxu0 0
        %599 = vmatpush.bf16.msra.mxu0 0
        %600 = vmatpush.bf16.msra.mxu0 0
        %601 = vmatpush.bf16.msra.mxu0 %v596
        %602 = vmatpush.bf16.msra.mxu0 %v586
        %603 = vmatpush.bf16.msra.mxu0 %v585
        %604 = vmatpush.bf16.msra.mxu0 %v584
        %605 = vmatpush.bf16.msra.mxu0 %v583
        %606 = vmatmul.bf16.gmra.mxu0 %v593
        %v607 = vpop.f32.mrf.mxu0
        %v608 = vadd.f32 %v562, %v607
        %v609 = vpop.f32.mrf.mxu0
        %610 = vdwg.mxu0
        %v611 = vld [vmem:[#allocation2 + $0x2] sm:$0xff]
        %v612 = vpack.c.bf16 %v611, %v611
        %s613 = scalar_lea.vmem %s3, 72
        %v614 = vld [vmem:[%s613] sm:$0xf]
        %v615 = vld [vmem:[%s613 + $0x4] sm:$0xf]
        %v616 = vld [vmem:[%s613 + $0x8] sm:$0xf]
        %v617 = vld [vmem:[%s613 + $0xc] sm:$0xf]
        %v618 = vld [vmem:[%s613 + $0x10] sm:$0xf]
        %v619 = vld [vmem:[%s613 + $0x14] sm:$0xf]
        %v620 = vld [vmem:[%s613 + $0x18] sm:$0xf]
        %v621 = vld [vmem:[%s613 + $0x1c] sm:$0xf]
        %v622 = vld [vmem:[%s613 + $0x20] sm:$0xf]
        %v632 = vunpack.c.l.b16 %v614
        %v633 = vunpack.c.l.b16 %v615
        %v634 = vunpack.c.l.b16 %v616
        %v635 = vunpack.c.l.b16 %v617
        %v636 = vunpack.c.l.b16 %v618
        %v637 = vunpack.c.l.b16 %v619
        %v638 = vunpack.c.l.b16 %v620
        %v639 = vunpack.c.l.b16 %v621
        %v640 = vunpack.c.l.b16 %v622
        %v641 = vpack.c.b16 %v633, %v632
        %v642 = vpack.c.b16 %v635, %v634
        %v643 = vpack.c.b16 %v637, %v636
        %v644 = vpack.c.b16 %v639, %v638
        %v645 = vpack.c.b16 %v640, %v640
        %v651 = vsel %vm491, %v612, 0
        %v654 = vsel %vm548, %v645, 0
        %656 = vmatpush.bf16.msra.mxu0 0
        %657 = vmatpush.bf16.msra.mxu0 0
        %658 = vmatpush.bf16.msra.mxu0 0
        %659 = vmatpush.bf16.msra.mxu0 %v654
        %660 = vmatpush.bf16.msra.mxu0 %v644
        %661 = vmatpush.bf16.msra.mxu0 %v643
        %662 = vmatpush.bf16.msra.mxu0 %v642
        %663 = vmatpush.bf16.msra.mxu0 %v641
        %664 = vmatmul.bf16.gmra.mxu0 %v651
        %v665 = vpop.f32.mrf.mxu0
        %v666 = vadd.f32 0.0, %v665
        %v667 = vpop.f32.mrf.mxu0
        %668 = vdwg.mxu0
        %v669 = vadd.f32 %v608, %v666
        %v670 = vld [vmem:[#allocation2 + $0x3] sm:$0xff]
        %v671 = vpack.c.bf16 %v670, %v670
        %s672 = scalar_lea.vmem %s3, 108
        %v673 = vld [vmem:[%s672] sm:$0xf]
        %v674 = vld [vmem:[%s672 + $0x4] sm:$0xf]
        %v675 = vld [vmem:[%s672 + $0x8] sm:$0xf]
        %v676 = vld [vmem:[%s672 + $0xc] sm:$0xf]
        %v677 = vld [vmem:[%s672 + $0x10] sm:$0xf]
        %v678 = vld [vmem:[%s672 + $0x14] sm:$0xf]
        %v679 = vld [vmem:[%s672 + $0x18] sm:$0xf]
        %v680 = vld [vmem:[%s672 + $0x1c] sm:$0xf]
        %v681 = vld [vmem:[%s672 + $0x20] sm:$0xf]
        %v691 = vunpack.c.l.b16 %v673
        %v692 = vunpack.c.l.b16 %v674
        %v693 = vunpack.c.l.b16 %v675
        %v694 = vunpack.c.l.b16 %v676
        %v695 = vunpack.c.l.b16 %v677
        %v696 = vunpack.c.l.b16 %v678
        %v697 = vunpack.c.l.b16 %v679
        %v698 = vunpack.c.l.b16 %v680
        %v699 = vunpack.c.l.b16 %v681
        %v700 = vpack.c.b16 %v692, %v691
        %v701 = vpack.c.b16 %v694, %v693
        %v702 = vpack.c.b16 %v696, %v695
        %v703 = vpack.c.b16 %v698, %v697
        %v704 = vpack.c.b16 %v699, %v699
        %v710 = vsel %vm491, %v671, 0
        %v713 = vsel %vm548, %v704, 0
        %715 = vmatpush.bf16.msra.mxu0 0
        %716 = vmatpush.bf16.msra.mxu0 0
        %717 = vmatpush.bf16.msra.mxu0 0
        %718 = vmatpush.bf16.msra.mxu0 %v713
        %719 = vmatpush.bf16.msra.mxu0 %v703
        %720 = vmatpush.bf16.msra.mxu0 %v702
        %721 = vmatpush.bf16.msra.mxu0 %v701
        %722 = vmatpush.bf16.msra.mxu0 %v700
        %723 = vmatmul.bf16.gmra.mxu0 %v710
        %v724 = vpop.f32.mrf.mxu0
        %v725 = vadd.f32 0.0, %v724
        %v726 = vpop.f32.mrf.mxu0
        %727 = vdwg.mxu0
        %v728 = vadd.f32 %v669, %v725
        %v729 = vld [vmem:[#allocation2 + $0x4] sm:$0xff]
        %v730 = vpack.c.bf16 %v729, %v729
        %s731 = scalar_lea.vmem %s3, 144
        %v732 = vld [vmem:[%s731] sm:$0xf]
        %v733 = vld [vmem:[%s731 + $0x4] sm:$0xf]
        %v734 = vld [vmem:[%s731 + $0x8] sm:$0xf]
        %v735 = vld [vmem:[%s731 + $0xc] sm:$0xf]
        %v736 = vld [vmem:[%s731 + $0x10] sm:$0xf]
        %v737 = vld [vmem:[%s731 + $0x14] sm:$0xf]
        %v738 = vld [vmem:[%s731 + $0x18] sm:$0xf]
        %v739 = vld [vmem:[%s731 + $0x1c] sm:$0xf]
        %v740 = vld [vmem:[%s731 + $0x20] sm:$0xf]
        %v750 = vunpack.c.l.b16 %v732
        %v751 = vunpack.c.l.b16 %v733
        %v752 = vunpack.c.l.b16 %v734
        %v753 = vunpack.c.l.b16 %v735
        %v754 = vunpack.c.l.b16 %v736
        %v755 = vunpack.c.l.b16 %v737
        %v756 = vunpack.c.l.b16 %v738
        %v757 = vunpack.c.l.b16 %v739
        %v758 = vunpack.c.l.b16 %v740
        %v759 = vpack.c.b16 %v751, %v750
        %v760 = vpack.c.b16 %v753, %v752
        %v761 = vpack.c.b16 %v755, %v754
        %v762 = vpack.c.b16 %v757, %v756
        %v763 = vpack.c.b16 %v758, %v758
        %v769 = vsel %vm491, %v730, 0
        %v772 = vsel %vm548, %v763, 0
        %774 = vmatpush.bf16.msra.mxu0 0
        %775 = vmatpush.bf16.msra.mxu0 0
        %776 = vmatpush.bf16.msra.mxu0 0
        %777 = vmatpush.bf16.msra.mxu0 %v772
        %778 = vmatpush.bf16.msra.mxu0 %v762
        %779 = vmatpush.bf16.msra.mxu0 %v761
        %780 = vmatpush.bf16.msra.mxu0 %v760
        %781 = vmatpush.bf16.msra.mxu0 %v759
        %782 = vmatmul.bf16.gmra.mxu0 %v769
        %v783 = vpop.f32.mrf.mxu0
        %v784 = vadd.f32 0.0, %v783
        %v785 = vpop.f32.mrf.mxu0
        %786 = vdwg.mxu0
        %v787 = vadd.f32 %v728, %v784
        %v788 = vld [vmem:[%s4] sm:$0x1]
        %v790 = vperm.slane %v788, 0
        %v792 = vadd.f32 %v787, %v790
        %v793 = vmax.f32 %v792, 0.0
        %794 = vst [vmem:[#allocation3] sm:$0xff] 0.0
        %795 = vst [vmem:[#allocation3 + $0x8] sm:$0xff] 0.0
        %796 = vst [vmem:[#allocation3 + $0x10] sm:$0xff] 0.0
        %797 = vst [vmem:[#allocation3 + $0x18] sm:$0xff] 0.0
        %v799 = vrot.slane %v793, 4
        %800 = vrot.lane.b32.xlu0 %v799, 64
        %v801 = vpop.permute.xlu0 %800
        %vm803 = vcmask 1048068
        %804 = vst.msk [vmem:[#allocation3] sm:$0xf0] %vm803, %v801
        %vm805 = vcmask 523268
        %806 = vst.msk [vmem:[#allocation3 + $0x8] sm:$0xf0] %vm805, %v801
        %vm807 = vcmask 1043968
        %808 = vst.msk [vmem:[#allocation3 + $0x10] sm:$0xf] %vm807, %v801
        %vm809 = vcmask 519168
        %810 = vst.msk [vmem:[#allocation3 + $0x18] sm:$0xf] %vm809, %v801
        %v811 = vld [vmem:[#allocation3] sm:$0xff]
        %v812 = vld [vmem:[#allocation3 + $0x8] sm:$0xff]
        %v813 = vld [vmem:[#allocation3 + $0x10] sm:$0xf]
        %v814 = vld [vmem:[#allocation3 + $0x18] sm:$0xf]
        %v815 = vpack.c.bf16 %v813, %v811
        %v816 = vpack.c.bf16 %v814, %v812
        %v817 = vld [vmem:[%s5] sm:$0xf]
        %v818 = vld [vmem:[%s5 + $0x4] sm:$0xf]
        %v819 = vld [vmem:[%s5 + $0x8] sm:$0xf]
        %v820 = vld [vmem:[%s5 + $0xc] sm:$0xf]
        %v821 = vld [vmem:[%s5 + $0x10] sm:$0xf]
        %v822 = vld [vmem:[%s5 + $0x14] sm:$0xf]
        %v823 = vld [vmem:[%s5 + $0x18] sm:$0xf]
        %v824 = vld [vmem:[%s5 + $0x1c] sm:$0xf]
        %v825 = vld [vmem:[%s5 + $0x20] sm:$0xf]
        %v826 = vld [vmem:[%s5 + $0x24] sm:$0xf]
        %v827 = vld [vmem:[%s5 + $0x28] sm:$0xf]
        %v828 = vld [vmem:[%s5 + $0x2c] sm:$0xf]
        %v829 = vld [vmem:[%s5 + $0x30] sm:$0xf]
        %v830 = vld [vmem:[%s5 + $0x34] sm:$0xf]
        %v831 = vld [vmem:[%s5 + $0x38] sm:$0xf]
        %v832 = vld [vmem:[%s5 + $0x3c] sm:$0xf]
        %v833 = vld [vmem:[%s5 + $0x40] sm:$0xf]
        %v834 = vld [vmem:[%s5 + $0x44] sm:$0xf]
        %v835 = vld [vmem:[%s5 + $0x48] sm:$0xf]
        %v836 = vld [vmem:[%s5 + $0x4c] sm:$0xf]
        %v837 = vld [vmem:[%s5 + $0x50] sm:$0xf]
        %v838 = vld [vmem:[%s5 + $0x54] sm:$0xf]
        %v839 = vld [vmem:[%s5 + $0x58] sm:$0xf]
        %v840 = vld [vmem:[%s5 + $0x5c] sm:$0xf]
        %v841 = vld [vmem:[%s5 + $0x60] sm:$0xf]
        %v842 = vld [vmem:[%s5 + $0x64] sm:$0xf]
        %v843 = vld [vmem:[%s5 + $0x68] sm:$0xf]
        %v844 = vld [vmem:[%s5 + $0x6c] sm:$0xf]
        %v845 = vld [vmem:[%s5 + $0x70] sm:$0xf]
        %v846 = vld [vmem:[%s5 + $0x74] sm:$0xf]
        %v847 = vld [vmem:[%s5 + $0x78] sm:$0xf]
        %v848 = vld [vmem:[%s5 + $0x7c] sm:$0xf]
        %v849 = vld [vmem:[#allocation3] sm:$0xfe]
        %v850 = vld [vmem:[#allocation3 + $0x8] sm:$0xfe]
        %v851 = vld [vmem:[#allocation3 + $0x10] sm:$0x1f]
        %v852 = vld [vmem:[#allocation3 + $0x18] sm:$0x1f]
        %v853 = vpack.c.bf16 %v851, %v849
        %v854 = vpack.c.bf16 %v852, %v850
        %s855 = scalar_lea.vmem %s5, 128
        %v856 = vld [vmem:[%s855] sm:$0xf]
        %v857 = vld [vmem:[%s855 + $0x4] sm:$0xf]
        %v858 = vld [vmem:[%s855 + $0x8] sm:$0xf]
        %v859 = vld [vmem:[%s855 + $0xc] sm:$0xf]
        %v860 = vld [vmem:[%s855 + $0x10] sm:$0xf]
        %v861 = vld [vmem:[%s855 + $0x14] sm:$0xf]
        %v862 = vld [vmem:[%s855 + $0x18] sm:$0xf]
        %v863 = vld [vmem:[%s855 + $0x1c] sm:$0xf]
        %v864 = vld [vmem:[%s855 + $0x20] sm:$0xf]
        %v865 = vld [vmem:[%s855 + $0x24] sm:$0xf]
        %v866 = vld [vmem:[%s855 + $0x28] sm:$0xf]
        %v867 = vld [vmem:[%s855 + $0x2c] sm:$0xf]
        %v868 = vld [vmem:[%s855 + $0x30] sm:$0xf]
        %v869 = vld [vmem:[%s855 + $0x34] sm:$0xf]
        %v870 = vld [vmem:[%s855 + $0x38] sm:$0xf]
        %v871 = vld [vmem:[%s855 + $0x3c] sm:$0xf]
        %v872 = vld [vmem:[%s855 + $0x40] sm:$0xf]
        %v873 = vld [vmem:[%s855 + $0x44] sm:$0xf]
        %v874 = vld [vmem:[%s855 + $0x48] sm:$0xf]
        %v875 = vld [vmem:[%s855 + $0x4c] sm:$0xf]
        %v876 = vld [vmem:[%s855 + $0x50] sm:$0xf]
        %v877 = vld [vmem:[%s855 + $0x54] sm:$0xf]
        %v878 = vld [vmem:[%s855 + $0x58] sm:$0xf]
        %v879 = vld [vmem:[%s855 + $0x5c] sm:$0xf]
        %v880 = vld [vmem:[%s855 + $0x60] sm:$0xf]
        %v881 = vld [vmem:[%s855 + $0x64] sm:$0xf]
        %v882 = vld [vmem:[%s855 + $0x68] sm:$0xf]
        %v883 = vld [vmem:[%s855 + $0x6c] sm:$0xf]
        %v884 = vld [vmem:[%s855 + $0x70] sm:$0xf]
        %v885 = vld [vmem:[%s855 + $0x74] sm:$0xf]
        %v886 = vld [vmem:[%s855 + $0x78] sm:$0xf]
        %v887 = vld [vmem:[%s855 + $0x7c] sm:$0xf]
        %v889 = vshrl.u32 %v853, 16
        %v891 = vshll.u32 %v853, 16
        %v893 = vrot.slane %v891, 1
        %v894 = vor.u32 %v889, %v893
        %v896 = vshrl.u32 %v854, 16
        %v898 = vshll.u32 %v854, 16
        %v900 = vrot.slane %v898, 1
        %v901 = vor.u32 %v896, %v900
        %v936 = vunpack.c.l.b16 %v856
        %v937 = vunpack.c.l.b16 %v857
        %v938 = vunpack.c.l.b16 %v858
        %v939 = vunpack.c.l.b16 %v859
        %v940 = vunpack.c.l.b16 %v860
        %v941 = vunpack.c.l.b16 %v861
        %v942 = vunpack.c.l.b16 %v862
        %v943 = vunpack.c.l.b16 %v863
        %v944 = vunpack.c.l.b16 %v864
        %v945 = vunpack.c.l.b16 %v865
        %v946 = vunpack.c.l.b16 %v866
        %v947 = vunpack.c.l.b16 %v867
        %v948 = vunpack.c.l.b16 %v868
        %v949 = vunpack.c.l.b16 %v869
        %v950 = vunpack.c.l.b16 %v870
        %v951 = vunpack.c.l.b16 %v871
        %v952 = vunpack.c.l.b16 %v872
        %v953 = vunpack.c.l.b16 %v873
        %v954 = vunpack.c.l.b16 %v874
        %v955 = vunpack.c.l.b16 %v875
        %v956 = vunpack.c.l.b16 %v876
        %v957 = vunpack.c.l.b16 %v877
        %v958 = vunpack.c.l.b16 %v878
        %v959 = vunpack.c.l.b16 %v879
        %v960 = vunpack.c.l.b16 %v880
        %v961 = vunpack.c.l.b16 %v881
        %v962 = vunpack.c.l.b16 %v882
        %v963 = vunpack.c.l.b16 %v883
        %v964 = vunpack.c.l.b16 %v884
        %v965 = vunpack.c.l.b16 %v885
        %v966 = vunpack.c.l.b16 %v886
        %v967 = vunpack.c.l.b16 %v887
        %v968 = vpack.c.b16 %v937, %v936
        %v969 = vpack.c.b16 %v939, %v938
        %v970 = vpack.c.b16 %v941, %v940
        %v971 = vpack.c.b16 %v943, %v942
        %v972 = vpack.c.b16 %v945, %v944
        %v973 = vpack.c.b16 %v947, %v946
        %v974 = vpack.c.b16 %v949, %v948
        %v975 = vpack.c.b16 %v951, %v950
        %v976 = vpack.c.b16 %v953, %v952
        %v977 = vpack.c.b16 %v955, %v954
        %v978 = vpack.c.b16 %v957, %v956
        %v979 = vpack.c.b16 %v959, %v958
        %v980 = vpack.c.b16 %v961, %v960
        %v981 = vpack.c.b16 %v963, %v962
        %v982 = vpack.c.b16 %v965, %v964
        %v983 = vpack.c.b16 %v967, %v966
        %1000 = vmatpush.bf16.msra.mxu0 %v975
        %1001 = vmatpush.bf16.msra.mxu0 %v974
        %1002 = vmatpush.bf16.msra.mxu0 %v973
        %1003 = vmatpush.bf16.msra.mxu0 %v972
        %1004 = vmatpush.bf16.msra.mxu0 %v971
        %1005 = vmatpush.bf16.msra.mxu0 %v970
        %1006 = vmatpush.bf16.msra.mxu0 %v969
        %1007 = vmatpush.bf16.msra.mxu0 %v968
        %1008 = vmatmul.bf16.gmra.mxu0 %v894
        %v1009 = vpop.f32.mrf.mxu0
        %v1010 = vadd.f32 0.0, %v1009
        %v1011 = vpop.f32.mrf.mxu0
        %v1012 = vadd.f32 0.0, %v1011
        %1013 = vdwg.mxu0
        %1014 = vmatpush.bf16.msra.mxu0 %v983
        %1015 = vmatpush.bf16.msra.mxu0 %v982
        %1016 = vmatpush.bf16.msra.mxu0 %v981
        %1017 = vmatpush.bf16.msra.mxu0 %v980
        %1018 = vmatpush.bf16.msra.mxu0 %v979
        %1019 = vmatpush.bf16.msra.mxu0 %v978
        %1020 = vmatpush.bf16.msra.mxu0 %v977
        %1021 = vmatpush.bf16.msra.mxu0 %v976
        %1022 = vmatmul.bf16.gmra.mxu0 %v901
        %v1023 = vpop.f32.mrf.mxu0
        %v1024 = vadd.f32 %v1010, %v1023
        %v1025 = vpop.f32.mrf.mxu0
        %v1026 = vadd.f32 %v1012, %v1025
        %1027 = vdwg.mxu0
        %v1060 = vunpack.c.l.b16 %v817
        %v1061 = vunpack.c.l.b16 %v818
        %v1062 = vunpack.c.l.b16 %v819
        %v1063 = vunpack.c.l.b16 %v820
        %v1064 = vunpack.c.l.b16 %v821
        %v1065 = vunpack.c.l.b16 %v822
        %v1066 = vunpack.c.l.b16 %v823
        %v1067 = vunpack.c.l.b16 %v824
        %v1068 = vunpack.c.l.b16 %v825
        %v1069 = vunpack.c.l.b16 %v826
        %v1070 = vunpack.c.l.b16 %v827
        %v1071 = vunpack.c.l.b16 %v828
        %v1072 = vunpack.c.l.b16 %v829
        %v1073 = vunpack.c.l.b16 %v830
        %v1074 = vunpack.c.l.b16 %v831
        %v1075 = vunpack.c.l.b16 %v832
        %v1076 = vunpack.c.l.b16 %v833
        %v1077 = vunpack.c.l.b16 %v834
        %v1078 = vunpack.c.l.b16 %v835
        %v1079 = vunpack.c.l.b16 %v836
        %v1080 = vunpack.c.l.b16 %v837
        %v1081 = vunpack.c.l.b16 %v838
        %v1082 = vunpack.c.l.b16 %v839
        %v1083 = vunpack.c.l.b16 %v840
        %v1084 = vunpack.c.l.b16 %v841
        %v1085 = vunpack.c.l.b16 %v842
        %v1086 = vunpack.c.l.b16 %v843
        %v1087 = vunpack.c.l.b16 %v844
        %v1088 = vunpack.c.l.b16 %v845
        %v1089 = vunpack.c.l.b16 %v846
        %v1090 = vunpack.c.l.b16 %v847
        %v1091 = vunpack.c.l.b16 %v848
        %v1092 = vpack.c.b16 %v1061, %v1060
        %v1093 = vpack.c.b16 %v1063, %v1062
        %v1094 = vpack.c.b16 %v1065, %v1064
        %v1095 = vpack.c.b16 %v1067, %v1066
        %v1096 = vpack.c.b16 %v1069, %v1068
        %v1097 = vpack.c.b16 %v1071, %v1070
        %v1098 = vpack.c.b16 %v1073, %v1072
        %v1099 = vpack.c.b16 %v1075, %v1074
        %v1100 = vpack.c.b16 %v1077, %v1076
        %v1101 = vpack.c.b16 %v1079, %v1078
        %v1102 = vpack.c.b16 %v1081, %v1080
        %v1103 = vpack.c.b16 %v1083, %v1082
        %v1104 = vpack.c.b16 %v1085, %v1084
        %v1105 = vpack.c.b16 %v1087, %v1086
        %v1106 = vpack.c.b16 %v1089, %v1088
        %v1107 = vpack.c.b16 %v1091, %v1090
        %1124 = vmatpush.bf16.msra.mxu0 %v1099
        %1125 = vmatpush.bf16.msra.mxu0 %v1098
        %1126 = vmatpush.bf16.msra.mxu0 %v1097
        %1127 = vmatpush.bf16.msra.mxu0 %v1096
        %1128 = vmatpush.bf16.msra.mxu0 %v1095
        %1129 = vmatpush.bf16.msra.mxu0 %v1094
        %1130 = vmatpush.bf16.msra.mxu0 %v1093
        %1131 = vmatpush.bf16.msra.mxu0 %v1092
        %1132 = vmatmul.bf16.gmra.mxu0 %v815
        %v1133 = vpop.f32.mrf.mxu0
        %v1134 = vadd.f32 %v1024, %v1133
        %v1135 = vpop.f32.mrf.mxu0
        %v1136 = vadd.f32 %v1026, %v1135
        %1137 = vdwg.mxu0
        %1138 = vmatpush.bf16.msra.mxu0 %v1107
        %1139 = vmatpush.bf16.msra.mxu0 %v1106
        %1140 = vmatpush.bf16.msra.mxu0 %v1105
        %1141 = vmatpush.bf16.msra.mxu0 %v1104
        %1142 = vmatpush.bf16.msra.mxu0 %v1103
        %1143 = vmatpush.bf16.msra.mxu0 %v1102
        %1144 = vmatpush.bf16.msra.mxu0 %v1101
        %1145 = vmatpush.bf16.msra.mxu0 %v1100
        %1146 = vmatmul.bf16.gmra.mxu0 %v816
        %v1147 = vpop.f32.mrf.mxu0
        %v1148 = vadd.f32 %v1134, %v1147
        %v1149 = vpop.f32.mrf.mxu0
        %v1150 = vadd.f32 %v1136, %v1149
        %1151 = vdwg.mxu0
        %v1152 = vld [vmem:[#allocation3] sm:$0xfc]
        %v1153 = vld [vmem:[#allocation3 + $0x8] sm:$0xfc]
        %v1154 = vld [vmem:[#allocation3 + $0x10] sm:$0x3f]
        %v1155 = vld [vmem:[#allocation3 + $0x18] sm:$0x3f]
        %v1156 = vpack.c.bf16 %v1154, %v1152
        %v1157 = vpack.c.bf16 %v1155, %v1153
        %s1158 = scalar_lea.vmem %s5, 256
        %v1159 = vld [vmem:[%s1158] sm:$0xf]
        %v1160 = vld [vmem:[%s1158 + $0x4] sm:$0xf]
        %v1161 = vld [vmem:[%s1158 + $0x8] sm:$0xf]
        %v1162 = vld [vmem:[%s1158 + $0xc] sm:$0xf]
        %v1163 = vld [vmem:[%s1158 + $0x10] sm:$0xf]
        %v1164 = vld [vmem:[%s1158 + $0x14] sm:$0xf]
        %v1165 = vld [vmem:[%s1158 + $0x18] sm:$0xf]
        %v1166 = vld [vmem:[%s1158 + $0x1c] sm:$0xf]
        %v1167 = vld [vmem:[%s1158 + $0x20] sm:$0xf]
        %v1168 = vld [vmem:[%s1158 + $0x24] sm:$0xf]
        %v1169 = vld [vmem:[%s1158 + $0x28] sm:$0xf]
        %v1170 = vld [vmem:[%s1158 + $0x2c] sm:$0xf]
        %v1171 = vld [vmem:[%s1158 + $0x30] sm:$0xf]
        %v1172 = vld [vmem:[%s1158 + $0x34] sm:$0xf]
        %v1173 = vld [vmem:[%s1158 + $0x38] sm:$0xf]
        %v1174 = vld [vmem:[%s1158 + $0x3c] sm:$0xf]
        %v1175 = vld [vmem:[%s1158 + $0x40] sm:$0xf]
        %v1176 = vld [vmem:[%s1158 + $0x44] sm:$0xf]
        %v1177 = vld [vmem:[%s1158 + $0x48] sm:$0xf]
        %v1178 = vld [vmem:[%s1158 + $0x4c] sm:$0xf]
        %v1179 = vld [vmem:[%s1158 + $0x50] sm:$0xf]
        %v1180 = vld [vmem:[%s1158 + $0x54] sm:$0xf]
        %v1181 = vld [vmem:[%s1158 + $0x58] sm:$0xf]
        %v1182 = vld [vmem:[%s1158 + $0x5c] sm:$0xf]
        %v1183 = vld [vmem:[%s1158 + $0x60] sm:$0xf]
        %v1184 = vld [vmem:[%s1158 + $0x64] sm:$0xf]
        %v1185 = vld [vmem:[%s1158 + $0x68] sm:$0xf]
        %v1186 = vld [vmem:[%s1158 + $0x6c] sm:$0xf]
        %v1187 = vld [vmem:[%s1158 + $0x70] sm:$0xf]
        %v1188 = vld [vmem:[%s1158 + $0x74] sm:$0xf]
        %v1189 = vld [vmem:[%s1158 + $0x78] sm:$0xf]
        %v1190 = vld [vmem:[%s1158 + $0x7c] sm:$0xf]
        %v1193 = vrot.slane %v1156, 1
        %v1194 = vrot.slane %v1157, 1
        %v1229 = vunpack.c.l.b16 %v1159
        %v1230 = vunpack.c.l.b16 %v1160
        %v1231 = vunpack.c.l.b16 %v1161
        %v1232 = vunpack.c.l.b16 %v1162
        %v1233 = vunpack.c.l.b16 %v1163
        %v1234 = vunpack.c.l.b16 %v1164
        %v1235 = vunpack.c.l.b16 %v1165
        %v1236 = vunpack.c.l.b16 %v1166
        %v1237 = vunpack.c.l.b16 %v1167
        %v1238 = vunpack.c.l.b16 %v1168
        %v1239 = vunpack.c.l.b16 %v1169
        %v1240 = vunpack.c.l.b16 %v1170
        %v1241 = vunpack.c.l.b16 %v1171
        %v1242 = vunpack.c.l.b16 %v1172
        %v1243 = vunpack.c.l.b16 %v1173
        %v1244 = vunpack.c.l.b16 %v1174
        %v1245 = vunpack.c.l.b16 %v1175
        %v1246 = vunpack.c.l.b16 %v1176
        %v1247 = vunpack.c.l.b16 %v1177
        %v1248 = vunpack.c.l.b16 %v1178
        %v1249 = vunpack.c.l.b16 %v1179
        %v1250 = vunpack.c.l.b16 %v1180
        %v1251 = vunpack.c.l.b16 %v1181
        %v1252 = vunpack.c.l.b16 %v1182
        %v1253 = vunpack.c.l.b16 %v1183
        %v1254 = vunpack.c.l.b16 %v1184
        %v1255 = vunpack.c.l.b16 %v1185
        %v1256 = vunpack.c.l.b16 %v1186
        %v1257 = vunpack.c.l.b16 %v1187
        %v1258 = vunpack.c.l.b16 %v1188
        %v1259 = vunpack.c.l.b16 %v1189
        %v1260 = vunpack.c.l.b16 %v1190
        %v1261 = vpack.c.b16 %v1230, %v1229
        %v1262 = vpack.c.b16 %v1232, %v1231
        %v1263 = vpack.c.b16 %v1234, %v1233
        %v1264 = vpack.c.b16 %v1236, %v1235
        %v1265 = vpack.c.b16 %v1238, %v1237
        %v1266 = vpack.c.b16 %v1240, %v1239
        %v1267 = vpack.c.b16 %v1242, %v1241
        %v1268 = vpack.c.b16 %v1244, %v1243
        %v1269 = vpack.c.b16 %v1246, %v1245
        %v1270 = vpack.c.b16 %v1248, %v1247
        %v1271 = vpack.c.b16 %v1250, %v1249
        %v1272 = vpack.c.b16 %v1252, %v1251
        %v1273 = vpack.c.b16 %v1254, %v1253
        %v1274 = vpack.c.b16 %v1256, %v1255
        %v1275 = vpack.c.b16 %v1258, %v1257
        %v1276 = vpack.c.b16 %v1260, %v1259
        %1293 = vmatpush.bf16.msra.mxu0 %v1268
        %1294 = vmatpush.bf16.msra.mxu0 %v1267
        %1295 = vmatpush.bf16.msra.mxu0 %v1266
        %1296 = vmatpush.bf16.msra.mxu0 %v1265
        %1297 = vmatpush.bf16.msra.mxu0 %v1264
        %1298 = vmatpush.bf16.msra.mxu0 %v1263
        %1299 = vmatpush.bf16.msra.mxu0 %v1262
        %1300 = vmatpush.bf16.msra.mxu0 %v1261
        %1301 = vmatmul.bf16.gmra.mxu0 %v1193
        %v1302 = vpop.f32.mrf.mxu0
        %v1303 = vadd.f32 0.0, %v1302
        %v1304 = vpop.f32.mrf.mxu0
        %v1305 = vadd.f32 0.0, %v1304
        %1306 = vdwg.mxu0
        %1307 = vmatpush.bf16.msra.mxu0 %v1276
        %1308 = vmatpush.bf16.msra.mxu0 %v1275
        %1309 = vmatpush.bf16.msra.mxu0 %v1274
        %1310 = vmatpush.bf16.msra.mxu0 %v1273
        %1311 = vmatpush.bf16.msra.mxu0 %v1272
        %1312 = vmatpush.bf16.msra.mxu0 %v1271
        %1313 = vmatpush.bf16.msra.mxu0 %v1270
        %1314 = vmatpush.bf16.msra.mxu0 %v1269
        %1315 = vmatmul.bf16.gmra.mxu0 %v1194
        %v1316 = vpop.f32.mrf.mxu0
        %v1317 = vadd.f32 %v1303, %v1316
        %v1318 = vpop.f32.mrf.mxu0
        %v1319 = vadd.f32 %v1305, %v1318
        %1320 = vdwg.mxu0
        %v1321 = vadd.f32 %v1148, %v1317
        %v1322 = vadd.f32 %v1150, %v1319
        %v1323 = vld [vmem:[#allocation3] sm:$0xf8]
        %v1324 = vld [vmem:[#allocation3 + $0x8] sm:$0xf8]
        %v1325 = vld [vmem:[#allocation3 + $0x10] sm:$0x7f]
        %v1326 = vld [vmem:[#allocation3 + $0x18] sm:$0x7f]
        %v1327 = vpack.c.bf16 %v1325, %v1323
        %v1328 = vpack.c.bf16 %v1326, %v1324
        %s1329 = scalar_lea.vmem %s5, 384
        %v1330 = vld [vmem:[%s1329] sm:$0xf]
        %v1331 = vld [vmem:[%s1329 + $0x4] sm:$0xf]
        %v1332 = vld [vmem:[%s1329 + $0x8] sm:$0xf]
        %v1333 = vld [vmem:[%s1329 + $0xc] sm:$0xf]
        %v1334 = vld [vmem:[%s1329 + $0x10] sm:$0xf]
        %v1335 = vld [vmem:[%s1329 + $0x14] sm:$0xf]
        %v1336 = vld [vmem:[%s1329 + $0x18] sm:$0xf]
        %v1337 = vld [vmem:[%s1329 + $0x1c] sm:$0xf]
        %v1338 = vld [vmem:[%s1329 + $0x20] sm:$0xf]
        %v1339 = vld [vmem:[%s1329 + $0x24] sm:$0xf]
        %v1340 = vld [vmem:[%s1329 + $0x28] sm:$0xf]
        %v1341 = vld [vmem:[%s1329 + $0x2c] sm:$0xf]
        %v1342 = vld [vmem:[%s1329 + $0x30] sm:$0xf]
        %v1343 = vld [vmem:[%s1329 + $0x34] sm:$0xf]
        %v1344 = vld [vmem:[%s1329 + $0x38] sm:$0xf]
        %v1345 = vld [vmem:[%s1329 + $0x3c] sm:$0xf]
        %v1346 = vld [vmem:[%s1329 + $0x40] sm:$0xf]
        %v1347 = vld [vmem:[%s1329 + $0x44] sm:$0xf]
        %v1348 = vld [vmem:[%s1329 + $0x48] sm:$0xf]
        %v1349 = vld [vmem:[%s1329 + $0x4c] sm:$0xf]
        %v1350 = vld [vmem:[%s1329 + $0x50] sm:$0xf]
        %v1351 = vld [vmem:[%s1329 + $0x54] sm:$0xf]
        %v1352 = vld [vmem:[%s1329 + $0x58] sm:$0xf]
        %v1353 = vld [vmem:[%s1329 + $0x5c] sm:$0xf]
        %v1354 = vld [vmem:[%s1329 + $0x60] sm:$0xf]
        %v1355 = vld [vmem:[%s1329 + $0x64] sm:$0xf]
        %v1356 = vld [vmem:[%s1329 + $0x68] sm:$0xf]
        %v1357 = vld [vmem:[%s1329 + $0x6c] sm:$0xf]
        %v1358 = vld [vmem:[%s1329 + $0x70] sm:$0xf]
        %v1359 = vld [vmem:[%s1329 + $0x74] sm:$0xf]
        %v1360 = vld [vmem:[%s1329 + $0x78] sm:$0xf]
        %v1361 = vld [vmem:[%s1329 + $0x7c] sm:$0xf]
        %v1363 = vshrl.u32 %v1327, 16
        %v1365 = vrot.slane %v1363, 1
        %v1366 = vshll.u32 %v1327, 16
        %v1368 = vrot.slane %v1366, 2
        %v1369 = vor.u32 %v1365, %v1368
        %v1371 = vshrl.u32 %v1328, 16
        %v1373 = vrot.slane %v1371, 1
        %v1374 = vshll.u32 %v1328, 16
        %v1376 = vrot.slane %v1374, 2
        %v1377 = vor.u32 %v1373, %v1376
        %v1412 = vunpack.c.l.b16 %v1330
        %v1413 = vunpack.c.l.b16 %v1331
        %v1414 = vunpack.c.l.b16 %v1332
        %v1415 = vunpack.c.l.b16 %v1333
        %v1416 = vunpack.c.l.b16 %v1334
        %v1417 = vunpack.c.l.b16 %v1335
        %v1418 = vunpack.c.l.b16 %v1336
        %v1419 = vunpack.c.l.b16 %v1337
        %v1420 = vunpack.c.l.b16 %v1338
        %v1421 = vunpack.c.l.b16 %v1339
        %v1422 = vunpack.c.l.b16 %v1340
        %v1423 = vunpack.c.l.b16 %v1341
        %v1424 = vunpack.c.l.b16 %v1342
        %v1425 = vunpack.c.l.b16 %v1343
        %v1426 = vunpack.c.l.b16 %v1344
        %v1427 = vunpack.c.l.b16 %v1345
        %v1428 = vunpack.c.l.b16 %v1346
        %v1429 = vunpack.c.l.b16 %v1347
        %v1430 = vunpack.c.l.b16 %v1348
        %v1431 = vunpack.c.l.b16 %v1349
        %v1432 = vunpack.c.l.b16 %v1350
        %v1433 = vunpack.c.l.b16 %v1351
        %v1434 = vunpack.c.l.b16 %v1352
        %v1435 = vunpack.c.l.b16 %v1353
        %v1436 = vunpack.c.l.b16 %v1354
        %v1437 = vunpack.c.l.b16 %v1355
        %v1438 = vunpack.c.l.b16 %v1356
        %v1439 = vunpack.c.l.b16 %v1357
        %v1440 = vunpack.c.l.b16 %v1358
        %v1441 = vunpack.c.l.b16 %v1359
        %v1442 = vunpack.c.l.b16 %v1360
        %v1443 = vunpack.c.l.b16 %v1361
        %v1444 = vpack.c.b16 %v1413, %v1412
        %v1445 = vpack.c.b16 %v1415, %v1414
        %v1446 = vpack.c.b16 %v1417, %v1416
        %v1447 = vpack.c.b16 %v1419, %v1418
        %v1448 = vpack.c.b16 %v1421, %v1420
        %v1449 = vpack.c.b16 %v1423, %v1422
        %v1450 = vpack.c.b16 %v1425, %v1424
        %v1451 = vpack.c.b16 %v1427, %v1426
        %v1452 = vpack.c.b16 %v1429, %v1428
        %v1453 = vpack.c.b16 %v1431, %v1430
        %v1454 = vpack.c.b16 %v1433, %v1432
        %v1455 = vpack.c.b16 %v1435, %v1434
        %v1456 = vpack.c.b16 %v1437, %v1436
        %v1457 = vpack.c.b16 %v1439, %v1438
        %v1458 = vpack.c.b16 %v1441, %v1440
        %v1459 = vpack.c.b16 %v1443, %v1442
        %1476 = vmatpush.bf16.msra.mxu0 %v1451
        %1477 = vmatpush.bf16.msra.mxu0 %v1450
        %1478 = vmatpush.bf16.msra.mxu0 %v1449
        %1479 = vmatpush.bf16.msra.mxu0 %v1448
        %1480 = vmatpush.bf16.msra.mxu0 %v1447
        %1481 = vmatpush.bf16.msra.mxu0 %v1446
        %1482 = vmatpush.bf16.msra.mxu0 %v1445
        %1483 = vmatpush.bf16.msra.mxu0 %v1444
        %1484 = vmatmul.bf16.gmra.mxu0 %v1369
        %v1485 = vpop.f32.mrf.mxu0
        %v1486 = vadd.f32 0.0, %v1485
        %v1487 = vpop.f32.mrf.mxu0
        %v1488 = vadd.f32 0.0, %v1487
        %1489 = vdwg.mxu0
        %1490 = vmatpush.bf16.msra.mxu0 %v1459
        %1491 = vmatpush.bf16.msra.mxu0 %v1458
        %1492 = vmatpush.bf16.msra.mxu0 %v1457
        %1493 = vmatpush.bf16.msra.mxu0 %v1456
        %1494 = vmatpush.bf16.msra.mxu0 %v1455
        %1495 = vmatpush.bf16.msra.mxu0 %v1454
        %1496 = vmatpush.bf16.msra.mxu0 %v1453
        %1497 = vmatpush.bf16.msra.mxu0 %v1452
        %1498 = vmatmul.bf16.gmra.mxu0 %v1377
        %v1499 = vpop.f32.mrf.mxu0
        %v1500 = vadd.f32 %v1486, %v1499
        %v1501 = vpop.f32.mrf.mxu0
        %v1502 = vadd.f32 %v1488, %v1501
        %1503 = vdwg.mxu0
        %v1504 = vadd.f32 %v1321, %v1500
        %v1505 = vadd.f32 %v1322, %v1502
        %v1506 = vld [vmem:[#allocation3] sm:$0xf0]
        %v1507 = vld [vmem:[#allocation3 + $0x8] sm:$0xf0]
        %v1508 = vld [vmem:[#allocation3 + $0x10] sm:$0xff]
        %v1509 = vld [vmem:[#allocation3 + $0x18] sm:$0xff]
        %v1510 = vpack.c.bf16 %v1508, %v1506
        %v1511 = vpack.c.bf16 %v1509, %v1507
        %s1512 = scalar_lea.vmem %s5, 512
        %v1513 = vld [vmem:[%s1512] sm:$0xf]
        %v1514 = vld [vmem:[%s1512 + $0x4] sm:$0xf]
        %v1515 = vld [vmem:[%s1512 + $0x8] sm:$0xf]
        %v1516 = vld [vmem:[%s1512 + $0xc] sm:$0xf]
        %v1517 = vld [vmem:[%s1512 + $0x10] sm:$0xf]
        %v1518 = vld [vmem:[%s1512 + $0x14] sm:$0xf]
        %v1519 = vld [vmem:[%s1512 + $0x18] sm:$0xf]
        %v1520 = vld [vmem:[%s1512 + $0x1c] sm:$0xf]
        %v1521 = vld [vmem:[%s1512 + $0x20] sm:$0xf]
        %v1522 = vld [vmem:[%s1512 + $0x24] sm:$0xf]
        %v1523 = vld [vmem:[%s1512 + $0x28] sm:$0xf]
        %v1524 = vld [vmem:[%s1512 + $0x2c] sm:$0xf]
        %v1525 = vld [vmem:[%s1512 + $0x30] sm:$0xf]
        %v1526 = vld [vmem:[%s1512 + $0x34] sm:$0xf]
        %v1527 = vld [vmem:[%s1512 + $0x38] sm:$0xf]
        %v1528 = vld [vmem:[%s1512 + $0x3c] sm:$0xf]
        %v1529 = vld [vmem:[%s1512 + $0x40] sm:$0xf]
        %v1530 = vld [vmem:[%s1512 + $0x44] sm:$0xf]
        %v1531 = vld [vmem:[%s1512 + $0x48] sm:$0xf]
        %v1532 = vld [vmem:[%s1512 + $0x4c] sm:$0xf]
        %v1533 = vld [vmem:[%s1512 + $0x50] sm:$0xf]
        %v1534 = vld [vmem:[%s1512 + $0x54] sm:$0xf]
        %v1535 = vld [vmem:[%s1512 + $0x58] sm:$0xf]
        %v1536 = vld [vmem:[%s1512 + $0x5c] sm:$0xf]
        %v1537 = vld [vmem:[%s1512 + $0x60] sm:$0xf]
        %v1538 = vld [vmem:[%s1512 + $0x64] sm:$0xf]
        %v1539 = vld [vmem:[%s1512 + $0x68] sm:$0xf]
        %v1540 = vld [vmem:[%s1512 + $0x6c] sm:$0xf]
        %v1541 = vld [vmem:[%s1512 + $0x70] sm:$0xf]
        %v1542 = vld [vmem:[%s1512 + $0x74] sm:$0xf]
        %v1543 = vld [vmem:[%s1512 + $0x78] sm:$0xf]
        %v1544 = vld [vmem:[%s1512 + $0x7c] sm:$0xf]
        %v1547 = vrot.slane %v1510, 2
        %v1548 = vrot.slane %v1511, 2
        %v1583 = vunpack.c.l.b16 %v1513
        %v1584 = vunpack.c.l.b16 %v1514
        %v1585 = vunpack.c.l.b16 %v1515
        %v1586 = vunpack.c.l.b16 %v1516
        %v1587 = vunpack.c.l.b16 %v1517
        %v1588 = vunpack.c.l.b16 %v1518
        %v1589 = vunpack.c.l.b16 %v1519
        %v1590 = vunpack.c.l.b16 %v1520
        %v1591 = vunpack.c.l.b16 %v1521
        %v1592 = vunpack.c.l.b16 %v1522
        %v1593 = vunpack.c.l.b16 %v1523
        %v1594 = vunpack.c.l.b16 %v1524
        %v1595 = vunpack.c.l.b16 %v1525
        %v1596 = vunpack.c.l.b16 %v1526
        %v1597 = vunpack.c.l.b16 %v1527
        %v1598 = vunpack.c.l.b16 %v1528
        %v1599 = vunpack.c.l.b16 %v1529
        %v1600 = vunpack.c.l.b16 %v1530
        %v1601 = vunpack.c.l.b16 %v1531
        %v1602 = vunpack.c.l.b16 %v1532
        %v1603 = vunpack.c.l.b16 %v1533
        %v1604 = vunpack.c.l.b16 %v1534
        %v1605 = vunpack.c.l.b16 %v1535
        %v1606 = vunpack.c.l.b16 %v1536
        %v1607 = vunpack.c.l.b16 %v1537
        %v1608 = vunpack.c.l.b16 %v1538
        %v1609 = vunpack.c.l.b16 %v1539
        %v1610 = vunpack.c.l.b16 %v1540
        %v1611 = vunpack.c.l.b16 %v1541
        %v1612 = vunpack.c.l.b16 %v1542
        %v1613 = vunpack.c.l.b16 %v1543
        %v1614 = vunpack.c.l.b16 %v1544
        %v1615 = vpack.c.b16 %v1584, %v1583
        %v1616 = vpack.c.b16 %v1586, %v1585
        %v1617 = vpack.c.b16 %v1588, %v1587
        %v1618 = vpack.c.b16 %v1590, %v1589
        %v1619 = vpack.c.b16 %v1592, %v1591
        %v1620 = vpack.c.b16 %v1594, %v1593
        %v1621 = vpack.c.b16 %v1596, %v1595
        %v1622 = vpack.c.b16 %v1598, %v1597
        %v1623 = vpack.c.b16 %v1600, %v1599
        %v1624 = vpack.c.b16 %v1602, %v1601
        %v1625 = vpack.c.b16 %v1604, %v1603
        %v1626 = vpack.c.b16 %v1606, %v1605
        %v1627 = vpack.c.b16 %v1608, %v1607
        %v1628 = vpack.c.b16 %v1610, %v1609
        %v1629 = vpack.c.b16 %v1612, %v1611
        %v1630 = vpack.c.b16 %v1614, %v1613
        %1647 = vmatpush.bf16.msra.mxu0 %v1622
        %1648 = vmatpush.bf16.msra.mxu0 %v1621
        %1649 = vmatpush.bf16.msra.mxu0 %v1620
        %1650 = vmatpush.bf16.msra.mxu0 %v1619
        %1651 = vmatpush.bf16.msra.mxu0 %v1618
        %1652 = vmatpush.bf16.msra.mxu0 %v1617
        %1653 = vmatpush.bf16.msra.mxu0 %v1616
        %1654 = vmatpush.bf16.msra.mxu0 %v1615
        %1655 = vmatmul.bf16.gmra.mxu0 %v1547
        %v1656 = vpop.f32.mrf.mxu0
        %v1657 = vadd.f32 0.0, %v1656
        %v1658 = vpop.f32.mrf.mxu0
        %v1659 = vadd.f32 0.0, %v1658
        %1660 = vdwg.mxu0
        %1661 = vmatpush.bf16.msra.mxu0 %v1630
        %1662 = vmatpush.bf16.msra.mxu0 %v1629
        %1663 = vmatpush.bf16.msra.mxu0 %v1628
        %1664 = vmatpush.bf16.msra.mxu0 %v1627
        %1665 = vmatpush.bf16.msra.mxu0 %v1626
        %1666 = vmatpush.bf16.msra.mxu0 %v1625
        %1667 = vmatpush.bf16.msra.mxu0 %v1624
        %1668 = vmatpush.bf16.msra.mxu0 %v1623
        %1669 = vmatmul.bf16.gmra.mxu0 %v1548
        %v1670 = vpop.f32.mrf.mxu0
        %v1671 = vadd.f32 %v1657, %v1670
        %v1672 = vpop.f32.mrf.mxu0
        %v1673 = vadd.f32 %v1659, %v1672
        %1674 = vdwg.mxu0
        %v1675 = vadd.f32 %v1504, %v1671
        %v1676 = vadd.f32 %v1505, %v1673
        %v1677 = vld [vmem:[%s6] sm:$0x1]
        %v1679 = vperm.slane %v1677, 0
        %v1681 = vadd.f32 %v1675, %v1679
        %v1682 = vadd.f32 %v1676, %v1679
        %v1683 = vmax.f32 %v1681, 0.0
        %v1684 = vmax.f32 %v1682, 0.0
        %vm1685 = vcmask 982016
        %1686 = vst.msk [vmem:[#allocation4] sm:$0xff] %vm1685, 0.0
        %1687 = vst.msk [vmem:[#allocation4 + $0x8] sm:$0xff] %vm1685, 0.0
        %vm1688 = vcmask 977920
        %1689 = vst.msk [vmem:[#allocation4 + $0x10] sm:$0xf] %vm1688, 0.0
        %1692 = vrot.lane.b32.xlu0 %v1683, 24
        %v1693 = vpop.permute.xlu0 %1692
        %1694 = vrot.lane.b32.xlu0 %v1684, 24
        %v1695 = vpop.permute.xlu0 %1694
        %vm1698 = vcmask 785600
        %1699 = vst.msk [vmem:[#allocation4 + $0x4] sm:$0xff] %vm1698, %v1693
        %vm1700 = vcmask 781504
        %1701 = vst.msk [vmem:[#allocation4 + $0xc] sm:$0xf] %vm1700, %v1695
        %v1702 = vld [vmem:[#allocation4] sm:$0xff]
        %v1703 = vld [vmem:[#allocation4 + $0x8] sm:$0xff]
        %v1704 = vpack.c.bf16 %v1703, %v1702
        %v1705 = vld [vmem:[%s7] sm:$0xf]
        %v1706 = vld [vmem:[%s7 + $0x4] sm:$0xf]
        %v1707 = vld [vmem:[%s7 + $0x8] sm:$0xf]
        %v1708 = vld [vmem:[%s7 + $0xc] sm:$0xf]
        %v1709 = vld [vmem:[%s7 + $0x10] sm:$0xf]
        %v1710 = vld [vmem:[%s7 + $0x14] sm:$0xf]
        %v1711 = vld [vmem:[%s7 + $0x18] sm:$0xf]
        %v1712 = vld [vmem:[%s7 + $0x1c] sm:$0xf]
        %v1713 = vld [vmem:[%s7 + $0x20] sm:$0xf]
        %v1714 = vld [vmem:[%s7 + $0x24] sm:$0xf]
        %v1715 = vld [vmem:[%s7 + $0x28] sm:$0xf]
        %v1716 = vld [vmem:[%s7 + $0x2c] sm:$0xf]
        %v1717 = vld [vmem:[%s7 + $0x30] sm:$0xf]
        %v1718 = vld [vmem:[%s7 + $0x34] sm:$0xf]
        %v1719 = vld [vmem:[%s7 + $0x38] sm:$0xf]
        %v1720 = vld [vmem:[#allocation4 + $0x1] sm:$0xff]
        %v1721 = vld [vmem:[#allocation4 + $0x9] sm:$0xff]
        %v1722 = vpack.c.bf16 %v1721, %v1720
        %s1723 = scalar_lea.vmem %s7, 60
        %v1724 = vld [vmem:[%s1723] sm:$0xf]
        %v1725 = vld [vmem:[%s1723 + $0x4] sm:$0xf]
        %v1726 = vld [vmem:[%s1723 + $0x8] sm:$0xf]
        %v1727 = vld [vmem:[%s1723 + $0xc] sm:$0xf]
        %v1728 = vld [vmem:[%s1723 + $0x10] sm:$0xf]
        %v1729 = vld [vmem:[%s1723 + $0x14] sm:$0xf]
        %v1730 = vld [vmem:[%s1723 + $0x18] sm:$0xf]
        %v1731 = vld [vmem:[%s1723 + $0x1c] sm:$0xf]
        %v1732 = vld [vmem:[%s1723 + $0x20] sm:$0xf]
        %v1733 = vld [vmem:[%s1723 + $0x24] sm:$0xf]
        %v1734 = vld [vmem:[%s1723 + $0x28] sm:$0xf]
        %v1735 = vld [vmem:[%s1723 + $0x2c] sm:$0xf]
        %v1736 = vld [vmem:[%s1723 + $0x30] sm:$0xf]
        %v1737 = vld [vmem:[%s1723 + $0x34] sm:$0xf]
        %v1738 = vld [vmem:[%s1723 + $0x38] sm:$0xf]
        %v1754 = vunpack.c.l.b16 %v1724
        %v1755 = vunpack.c.l.b16 %v1725
        %v1756 = vunpack.c.l.b16 %v1726
        %v1757 = vunpack.c.l.b16 %v1727
        %v1758 = vunpack.c.l.b16 %v1728
        %v1759 = vunpack.c.l.b16 %v1729
        %v1760 = vunpack.c.l.b16 %v1730
        %v1761 = vunpack.c.l.b16 %v1731
        %v1762 = vunpack.c.l.b16 %v1732
        %v1763 = vunpack.c.l.b16 %v1733
        %v1764 = vunpack.c.l.b16 %v1734
        %v1765 = vunpack.c.l.b16 %v1735
        %v1766 = vunpack.c.l.b16 %v1736
        %v1767 = vunpack.c.l.b16 %v1737
        %v1768 = vunpack.c.l.b16 %v1738
        %v1769 = vpack.c.b16 %v1755, %v1754
        %v1770 = vpack.c.b16 %v1757, %v1756
        %v1771 = vpack.c.b16 %v1759, %v1758
        %v1772 = vpack.c.b16 %v1761, %v1760
        %v1773 = vpack.c.b16 %v1763, %v1762
        %v1774 = vpack.c.b16 %v1765, %v1764
        %v1775 = vpack.c.b16 %v1767, %v1766
        %v1776 = vpack.c.b16 %v1768, %v1768
        %v1785 = vsel %vm1685, %v1722, 0
        %v1788 = vsel %vm548, %v1776, 0
        %1790 = vmatpush.bf16.msra.mxu0 %v1788
        %1791 = vmatpush.bf16.msra.mxu0 %v1775
        %1792 = vmatpush.bf16.msra.mxu0 %v1774
        %1793 = vmatpush.bf16.msra.mxu0 %v1773
        %1794 = vmatpush.bf16.msra.mxu0 %v1772
        %1795 = vmatpush.bf16.msra.mxu0 %v1771
        %1796 = vmatpush.bf16.msra.mxu0 %v1770
        %1797 = vmatpush.bf16.msra.mxu0 %v1769
        %1798 = vmatmul.bf16.gmra.mxu0 %v1785
        %v1799 = vpop.f32.mrf.mxu0
        %v1800 = vadd.f32 0.0, %v1799
        %v1801 = vpop.f32.mrf.mxu0
        %v1802 = vadd.f32 0.0, %v1801
        %1803 = vdwg.mxu0
        %v1819 = vunpack.c.l.b16 %v1705
        %v1820 = vunpack.c.l.b16 %v1706
        %v1821 = vunpack.c.l.b16 %v1707
        %v1822 = vunpack.c.l.b16 %v1708
        %v1823 = vunpack.c.l.b16 %v1709
        %v1824 = vunpack.c.l.b16 %v1710
        %v1825 = vunpack.c.l.b16 %v1711
        %v1826 = vunpack.c.l.b16 %v1712
        %v1827 = vunpack.c.l.b16 %v1713
        %v1828 = vunpack.c.l.b16 %v1714
        %v1829 = vunpack.c.l.b16 %v1715
        %v1830 = vunpack.c.l.b16 %v1716
        %v1831 = vunpack.c.l.b16 %v1717
        %v1832 = vunpack.c.l.b16 %v1718
        %v1833 = vunpack.c.l.b16 %v1719
        %v1834 = vpack.c.b16 %v1820, %v1819
        %v1835 = vpack.c.b16 %v1822, %v1821
        %v1836 = vpack.c.b16 %v1824, %v1823
        %v1837 = vpack.c.b16 %v1826, %v1825
        %v1838 = vpack.c.b16 %v1828, %v1827
        %v1839 = vpack.c.b16 %v1830, %v1829
        %v1840 = vpack.c.b16 %v1832, %v1831
        %v1841 = vpack.c.b16 %v1833, %v1833
        %v1850 = vsel %vm1685, %v1704, 0
        %v1853 = vsel %vm548, %v1841, 0
        %1855 = vmatpush.bf16.msra.mxu0 %v1853
        %1856 = vmatpush.bf16.msra.mxu0 %v1840
        %1857 = vmatpush.bf16.msra.mxu0 %v1839
        %1858 = vmatpush.bf16.msra.mxu0 %v1838
        %1859 = vmatpush.bf16.msra.mxu0 %v1837
        %1860 = vmatpush.bf16.msra.mxu0 %v1836
        %1861 = vmatpush.bf16.msra.mxu0 %v1835
        %1862 = vmatpush.bf16.msra.mxu0 %v1834
        %1863 = vmatmul.bf16.gmra.mxu0 %v1850
        %v1864 = vpop.f32.mrf.mxu0
        %v1865 = vadd.f32 %v1800, %v1864
        %v1866 = vpop.f32.mrf.mxu0
        %v1867 = vadd.f32 %v1802, %v1866
        %1868 = vdwg.mxu0
        %v1869 = vld [vmem:[#allocation4 + $0x2] sm:$0xff]
        %v1870 = vld [vmem:[#allocation4 + $0xa] sm:$0xff]
        %v1871 = vpack.c.bf16 %v1870, %v1869
        %s1872 = scalar_lea.vmem %s7, 120
        %v1873 = vld [vmem:[%s1872] sm:$0xf]
        %v1874 = vld [vmem:[%s1872 + $0x4] sm:$0xf]
        %v1875 = vld [vmem:[%s1872 + $0x8] sm:$0xf]
        %v1876 = vld [vmem:[%s1872 + $0xc] sm:$0xf]
        %v1877 = vld [vmem:[%s1872 + $0x10] sm:$0xf]
        %v1878 = vld [vmem:[%s1872 + $0x14] sm:$0xf]
        %v1879 = vld [vmem:[%s1872 + $0x18] sm:$0xf]
        %v1880 = vld [vmem:[%s1872 + $0x1c] sm:$0xf]
        %v1881 = vld [vmem:[%s1872 + $0x20] sm:$0xf]
        %v1882 = vld [vmem:[%s1872 + $0x24] sm:$0xf]
        %v1883 = vld [vmem:[%s1872 + $0x28] sm:$0xf]
        %v1884 = vld [vmem:[%s1872 + $0x2c] sm:$0xf]
        %v1885 = vld [vmem:[%s1872 + $0x30] sm:$0xf]
        %v1886 = vld [vmem:[%s1872 + $0x34] sm:$0xf]
        %v1887 = vld [vmem:[%s1872 + $0x38] sm:$0xf]
        %v1903 = vunpack.c.l.b16 %v1873
        %v1904 = vunpack.c.l.b16 %v1874
        %v1905 = vunpack.c.l.b16 %v1875
        %v1906 = vunpack.c.l.b16 %v1876
        %v1907 = vunpack.c.l.b16 %v1877
        %v1908 = vunpack.c.l.b16 %v1878
        %v1909 = vunpack.c.l.b16 %v1879
        %v1910 = vunpack.c.l.b16 %v1880
        %v1911 = vunpack.c.l.b16 %v1881
        %v1912 = vunpack.c.l.b16 %v1882
        %v1913 = vunpack.c.l.b16 %v1883
        %v1914 = vunpack.c.l.b16 %v1884
        %v1915 = vunpack.c.l.b16 %v1885
        %v1916 = vunpack.c.l.b16 %v1886
        %v1917 = vunpack.c.l.b16 %v1887
        %v1918 = vpack.c.b16 %v1904, %v1903
        %v1919 = vpack.c.b16 %v1906, %v1905
        %v1920 = vpack.c.b16 %v1908, %v1907
        %v1921 = vpack.c.b16 %v1910, %v1909
        %v1922 = vpack.c.b16 %v1912, %v1911
        %v1923 = vpack.c.b16 %v1914, %v1913
        %v1924 = vpack.c.b16 %v1916, %v1915
        %v1925 = vpack.c.b16 %v1917, %v1917
        %v1934 = vsel %vm1685, %v1871, 0
        %v1937 = vsel %vm548, %v1925, 0
        %1939 = vmatpush.bf16.msra.mxu0 %v1937
        %1940 = vmatpush.bf16.msra.mxu0 %v1924
        %1941 = vmatpush.bf16.msra.mxu0 %v1923
        %1942 = vmatpush.bf16.msra.mxu0 %v1922
        %1943 = vmatpush.bf16.msra.mxu0 %v1921
        %1944 = vmatpush.bf16.msra.mxu0 %v1920
        %1945 = vmatpush.bf16.msra.mxu0 %v1919
        %1946 = vmatpush.bf16.msra.mxu0 %v1918
        %1947 = vmatmul.bf16.gmra.mxu0 %v1934
        %v1948 = vpop.f32.mrf.mxu0
        %v1949 = vadd.f32 0.0, %v1948
        %v1950 = vpop.f32.mrf.mxu0
        %v1951 = vadd.f32 0.0, %v1950
        %1952 = vdwg.mxu0
        %v1953 = vadd.f32 %v1865, %v1949
        %v1954 = vadd.f32 %v1867, %v1951
        %v1955 = vld [vmem:[#allocation4 + $0x3] sm:$0xff]
        %v1956 = vld [vmem:[#allocation4 + $0xb] sm:$0xff]
        %v1957 = vpack.c.bf16 %v1956, %v1955
        %s1958 = scalar_lea.vmem %s7, 180
        %v1959 = vld [vmem:[%s1958] sm:$0xf]
        %v1960 = vld [vmem:[%s1958 + $0x4] sm:$0xf]
        %v1961 = vld [vmem:[%s1958 + $0x8] sm:$0xf]
        %v1962 = vld [vmem:[%s1958 + $0xc] sm:$0xf]
        %v1963 = vld [vmem:[%s1958 + $0x10] sm:$0xf]
        %v1964 = vld [vmem:[%s1958 + $0x14] sm:$0xf]
        %v1965 = vld [vmem:[%s1958 + $0x18] sm:$0xf]
        %v1966 = vld [vmem:[%s1958 + $0x1c] sm:$0xf]
        %v1967 = vld [vmem:[%s1958 + $0x20] sm:$0xf]
        %v1968 = vld [vmem:[%s1958 + $0x24] sm:$0xf]
        %v1969 = vld [vmem:[%s1958 + $0x28] sm:$0xf]
        %v1970 = vld [vmem:[%s1958 + $0x2c] sm:$0xf]
        %v1971 = vld [vmem:[%s1958 + $0x30] sm:$0xf]
        %v1972 = vld [vmem:[%s1958 + $0x34] sm:$0xf]
        %v1973 = vld [vmem:[%s1958 + $0x38] sm:$0xf]
        %v1989 = vunpack.c.l.b16 %v1959
        %v1990 = vunpack.c.l.b16 %v1960
        %v1991 = vunpack.c.l.b16 %v1961
        %v1992 = vunpack.c.l.b16 %v1962
        %v1993 = vunpack.c.l.b16 %v1963
        %v1994 = vunpack.c.l.b16 %v1964
        %v1995 = vunpack.c.l.b16 %v1965
        %v1996 = vunpack.c.l.b16 %v1966
        %v1997 = vunpack.c.l.b16 %v1967
        %v1998 = vunpack.c.l.b16 %v1968
        %v1999 = vunpack.c.l.b16 %v1969
        %v2000 = vunpack.c.l.b16 %v1970
        %v2001 = vunpack.c.l.b16 %v1971
        %v2002 = vunpack.c.l.b16 %v1972
        %v2003 = vunpack.c.l.b16 %v1973
        %v2004 = vpack.c.b16 %v1990, %v1989
        %v2005 = vpack.c.b16 %v1992, %v1991
        %v2006 = vpack.c.b16 %v1994, %v1993
        %v2007 = vpack.c.b16 %v1996, %v1995
        %v2008 = vpack.c.b16 %v1998, %v1997
        %v2009 = vpack.c.b16 %v2000, %v1999
        %v2010 = vpack.c.b16 %v2002, %v2001
        %v2011 = vpack.c.b16 %v2003, %v2003
        %v2020 = vsel %vm1685, %v1957, 0
        %v2023 = vsel %vm548, %v2011, 0
        %2025 = vmatpush.bf16.msra.mxu0 %v2023
        %2026 = vmatpush.bf16.msra.mxu0 %v2010
        %2027 = vmatpush.bf16.msra.mxu0 %v2009
        %2028 = vmatpush.bf16.msra.mxu0 %v2008
        %2029 = vmatpush.bf16.msra.mxu0 %v2007
        %2030 = vmatpush.bf16.msra.mxu0 %v2006
        %2031 = vmatpush.bf16.msra.mxu0 %v2005
        %2032 = vmatpush.bf16.msra.mxu0 %v2004
        %2033 = vmatmul.bf16.gmra.mxu0 %v2020
        %v2034 = vpop.f32.mrf.mxu0
        %v2035 = vadd.f32 0.0, %v2034
        %v2036 = vpop.f32.mrf.mxu0
        %v2037 = vadd.f32 0.0, %v2036
        %2038 = vdwg.mxu0
        %v2039 = vadd.f32 %v1953, %v2035
        %v2040 = vadd.f32 %v1954, %v2037
        %v2041 = vld [vmem:[#allocation4 + $0x4] sm:$0xff]
        %v2042 = vld [vmem:[#allocation4 + $0xc] sm:$0xff]
        %v2043 = vpack.c.bf16 %v2042, %v2041
        %s2044 = scalar_lea.vmem %s7, 240
        %v2045 = vld [vmem:[%s2044] sm:$0xf]
        %v2046 = vld [vmem:[%s2044 + $0x4] sm:$0xf]
        %v2047 = vld [vmem:[%s2044 + $0x8] sm:$0xf]
        %v2048 = vld [vmem:[%s2044 + $0xc] sm:$0xf]
        %v2049 = vld [vmem:[%s2044 + $0x10] sm:$0xf]
        %v2050 = vld [vmem:[%s2044 + $0x14] sm:$0xf]
        %v2051 = vld [vmem:[%s2044 + $0x18] sm:$0xf]
        %v2052 = vld [vmem:[%s2044 + $0x1c] sm:$0xf]
        %v2053 = vld [vmem:[%s2044 + $0x20] sm:$0xf]
        %v2054 = vld [vmem:[%s2044 + $0x24] sm:$0xf]
        %v2055 = vld [vmem:[%s2044 + $0x28] sm:$0xf]
        %v2056 = vld [vmem:[%s2044 + $0x2c] sm:$0xf]
        %v2057 = vld [vmem:[%s2044 + $0x30] sm:$0xf]
        %v2058 = vld [vmem:[%s2044 + $0x34] sm:$0xf]
        %v2059 = vld [vmem:[%s2044 + $0x38] sm:$0xf]
        %v2075 = vunpack.c.l.b16 %v2045
        %v2076 = vunpack.c.l.b16 %v2046
        %v2077 = vunpack.c.l.b16 %v2047
        %v2078 = vunpack.c.l.b16 %v2048
        %v2079 = vunpack.c.l.b16 %v2049
        %v2080 = vunpack.c.l.b16 %v2050
        %v2081 = vunpack.c.l.b16 %v2051
        %v2082 = vunpack.c.l.b16 %v2052
        %v2083 = vunpack.c.l.b16 %v2053
        %v2084 = vunpack.c.l.b16 %v2054
        %v2085 = vunpack.c.l.b16 %v2055
        %v2086 = vunpack.c.l.b16 %v2056
        %v2087 = vunpack.c.l.b16 %v2057
        %v2088 = vunpack.c.l.b16 %v2058
        %v2089 = vunpack.c.l.b16 %v2059
        %v2090 = vpack.c.b16 %v2076, %v2075
        %v2091 = vpack.c.b16 %v2078, %v2077
        %v2092 = vpack.c.b16 %v2080, %v2079
        %v2093 = vpack.c.b16 %v2082, %v2081
        %v2094 = vpack.c.b16 %v2084, %v2083
        %v2095 = vpack.c.b16 %v2086, %v2085
        %v2096 = vpack.c.b16 %v2088, %v2087
        %v2097 = vpack.c.b16 %v2089, %v2089
        %v2106 = vsel %vm1685, %v2043, 0
        %v2109 = vsel %vm548, %v2097, 0
        %2111 = vmatpush.bf16.msra.mxu0 %v2109
        %2112 = vmatpush.bf16.msra.mxu0 %v2096
        %2113 = vmatpush.bf16.msra.mxu0 %v2095
        %2114 = vmatpush.bf16.msra.mxu0 %v2094
        %2115 = vmatpush.bf16.msra.mxu0 %v2093
        %2116 = vmatpush.bf16.msra.mxu0 %v2092
        %2117 = vmatpush.bf16.msra.mxu0 %v2091
        %2118 = vmatpush.bf16.msra.mxu0 %v2090
        %2119 = vmatmul.bf16.gmra.mxu0 %v2106
        %v2120 = vpop.f32.mrf.mxu0
        %v2121 = vadd.f32 0.0, %v2120
        %v2122 = vpop.f32.mrf.mxu0
        %v2123 = vadd.f32 0.0, %v2122
        %2124 = vdwg.mxu0
        %v2125 = vadd.f32 %v2039, %v2121
        %v2126 = vadd.f32 %v2040, %v2123
        %v2127 = vld [vmem:[%s8] sm:$0x1]
        %v2129 = vperm.slane %v2127, 0
        %v2131 = vadd.f32 %v2125, %v2129
        %v2132 = vadd.f32 %v2126, %v2129
        %v2133 = vmax.f32 %v2131, 0.0
        %v2134 = vmax.f32 %v2132, 0.0
        %v2135 = vxor.u32 %v2133, 2147483648
        %v2136 = vxor.u32 %v2134, 2147483648
        %v2137 = vmul.f32 %v2135, 1.442695
        %v2138 = vpow.pop %v2137
        %v2139 = vmul.f32 %v2136, 1.442695
        %v2140 = vpow.pop %v2139
        %v2141 = vadd.f32 %v2138, 1.0
        %v2142 = vadd.f32 %v2140, 1.0
        %v2143 = vrcp.pop %v2141
        %v2144 = vmul.f32 %v2141, %v2143
        %v2145 = vsub.f32 1.0, %v2144
        %v2146 = vmul.f32 %v2143, %v2145
        %v2147 = vadd.f32 %v2143, %v2146
        %vm2148 = vweird.f32 %v2141
        %vm2149 = vweird.f32 %v2143
        %vm2150 = vmor %vm2148, %vm2149
        %v2151 = vsel %vm2150, %v2143, %v2147
        %v2152 = vand.u32 2147483647, %v2141
        %vm2153 = vcmp.eq.f32.partialorder %v2152, 8.507059e+37
        %v2154 = vand.u32 %v2141, 2147483648
        %v2155 = vor.u32 1.1754944e-38, %v2154
        %v2156 = vsel %vm2153, %v2155, %v2151
        %v2157 = vmul.f32 1.0, %v2156
        %v2158 = vrcp.pop %v2142
        %v2159 = vmul.f32 %v2142, %v2158
        %v2160 = vsub.f32 1.0, %v2159
        %v2161 = vmul.f32 %v2158, %v2160
        %v2162 = vadd.f32 %v2158, %v2161
        %vm2163 = vweird.f32 %v2142
        %vm2164 = vweird.f32 %v2158
        %vm2165 = vmor %vm2163, %vm2164
        %v2166 = vsel %vm2165, %v2158, %v2162
        %v2167 = vand.u32 2147483647, %v2142
        %vm2168 = vcmp.eq.f32.partialorder %v2167, 8.507059e+37
        %v2169 = vand.u32 %v2142, 2147483648
        %v2170 = vor.u32 1.1754944e-38, %v2169
        %v2171 = vsel %vm2168, %v2170, %v2166
        %v2172 = vmul.f32 1.0, %v2171
        %2173 = vst.msk [vmem:[%s325] sm:$0xff] %vm349, %v2157
        %2174 = vst.msk [vmem:[%s325 + $0x8] sm:$0xff] %vm349, %v2172
        %s2175 = sand.u32 %s225, 1
        %s2176 = scalar_lea.sflag [#allocation6], %s2175
        %s2177 = sand.u32 %s225, 1
        %s2178 = smul.addr %s2177, 16
        %s2179 = scalar_lea.vmem [#allocation5], %s2178
        // Predicated region
        $region57: #{_forward_impl.1} parent=55 // pred_check
          %p2180 = pneg %p235
        $region58: #{_forward_impl.1} parent=55 // pred_check_branch
          %2182 = sbr.rel (%p2180) target = $region60
        $region59: #{_forward_impl.1} parent=55 // pred_region
          %2184 = vsyncadd %s2176, 0
          %s2185 = smul.addr %s23, 2
          %s2186 = smul.addr %s2185, 8
          %s2187 = scalar_lea.hbm %s9, %s2186
          %s2188 = sshll.u32 %s2179, 4
          %s2189 = int_to_ptr.vmem [resolvable:$true] %s2188
          %s2190 = sshll.u32 %s2187, 4
          %s2191 = int_to_ptr.hbm [resolvable:$true] %s2190
          %2196 = dma.vmem_to_hbm [thread:$0]  %s2189, 256, %s2191, %s2176, 128, 128, 8
        $region60: #{_forward_impl.1} parent=55 // pred_fallthru
          _
      $region56: #{_forward_impl.1} parent=5 // pred_fallthru
        _
      %p2197 = scmp.le.s32.totalorder 2, %s18
      // Predicated region
      $region61: #{_forward_impl.1} parent=5 // pred_check
        %p2198 = pneg %p2197
      $region62: #{_forward_impl.1} parent=5 // pred_check_branch
        %2200 = sbr.rel (%p2198) target = $region64
      $region63: #{_forward_impl.1} parent=5 // pred_region
        %s2201 = ssub.s32 %s18, 2
        // Predicated region
        $region65: #{_forward_impl.1} parent=63 // pred_check
          %p2202 = pneg %p241
        $region66: #{_forward_impl.1} parent=63 // pred_check_branch
          %2204 = sbr.rel (%p2202) target = $region68
        $region67: #{_forward_impl.1} parent=63 // pred_region
          %s2205 = sand.u32 %s226, 1
          %s2206 = scalar_lea.sflag [#allocation6], %s2205
          %s2207 = sand.u32 %s226, 1
          %s2208 = smul.addr %s2207, 16
          %s2209 = scalar_lea.vmem [#allocation5], %s2208
          %2211 = dma.done %s2206, 256
        $region68: #{_forward_impl.1} parent=63 // pred_fallthru
          _
      $region64: #{_forward_impl.1} parent=5 // pred_fallthru
        _
    $region6: #{_forward_impl.1} parent=1 // loop_footer
      %s22 = sadd.s32 1, %s18
    $region7: #{_forward_impl.1} parent=1 // loop_footer_branch
      %17 = sbr.rel target = $region3
    $region8: #{_forward_impl.1} parent=1 // loop_exit
      _
    %2212 = vsyncpa [#allocation6], 1
    %s2213 = scalar_lea.sflag [#allocation6], 1
    %2214 = vsyncpa %s2213, 1

</llo_original>
